<compile_context>
chip_gen: v5e
topology: v5e:2x2
jax: 0.10.0
libtpu: 0.0.40
codegen_flags: <defaults>
</compile_context>

<pallas_src>
import math
import jax
import jax.numpy as jnp
from jax.experimental import pallas as pl
from jax.experimental.pallas import tpu as pltpu


def _mha_kernel(q_ref, k_ref, v_ref,
                wq_ref, wk_ref, wv_ref,
                bq_ref, bk_ref, bv_ref,
                wo_ref, bo_ref,
                out_ref):
    nb, L, E = q_ref.shape
    S = k_ref.shape[1]
    H = wq_ref.shape[0]

    # Parameter tiles: load once per grid step, hoisted out of the batch loop.
    wq = wq_ref[...]          # (H, E, D)  pre-transposed, 1/sqrt(D) folded in
    wk = wk_ref[...]          # (H, E, D)
    wv = wv_ref[...]          # (H, E, D)
    bq = bq_ref[...]          # (H, 1, D)  scaled
    bk = bk_ref[...]          # (H, 1, D)
    bv = bv_ref[...]          # (H, 1, D)
    wo = wo_ref[...]          # (H, D, E_pad)
    bo = bo_ref[...]          # (1, E_pad)

    for b in range(nb):       # static, small batch block per grid step
        q = jnp.broadcast_to(q_ref[b][None], (H, L, E))   # (H, L, E)
        k = jnp.broadcast_to(k_ref[b][None], (H, S, E))   # (H, S, E)
        v = jnp.broadcast_to(v_ref[b][None], (H, S, E))   # (H, S, E)

        # Per-head input projections, batched over the head axis (MXU).
        qh = jnp.einsum('hle,hed->hld', q, wq,
                        preferred_element_type=jnp.float32) + bq
        kh = jnp.einsum('hse,hed->hsd', k, wk,
                        preferred_element_type=jnp.float32) + bk
        vh = jnp.einsum('hse,hed->hsd', v, wv,
                        preferred_element_type=jnp.float32) + bv

        # Scaled dot-product attention (scale already folded into qh/bq).
        s = jnp.einsum('hld,hsd->hls', qh, kh,
                       preferred_element_type=jnp.float32)
        s = s - jnp.max(s, axis=-1, keepdims=True)
        p = jnp.exp(s)
        p = p * pl.reciprocal(jnp.sum(p, axis=-1, keepdims=True), approx=True)
        o = jnp.einsum('hls,hsd->hld', p, vh,
                       preferred_element_type=jnp.float32)

        # Output projection: batched matmul over heads + reduce (no per-head
        # concatenation / lane shuffles).  Columns are padded to full lanes.
        out = jnp.einsum('hld,hde->hle', o, wo,
                         preferred_element_type=jnp.float32)
        out = jnp.sum(out, axis=0) + bo                    # (L, E_pad)
        out_ref[b] = out.astype(out_ref.dtype)


def _prep_params(params, num_heads, e_pad):
    """Per-head split, pre-transpose, fold the 1/sqrt(D) scale, pad out-proj."""
    wq, wk, wv, bq, bk, bv, wo, bo = params
    E = wq.shape[0]
    H = num_heads
    D = E // H
    scale = 1.0 / math.sqrt(D)

    def per_head_in(w):   # (E, E) -> (H, E, D): head h gets W[h*D:(h+1)*D, :].T
        return jnp.transpose(w.reshape(H, D, E), (0, 2, 1))

    wq_h = per_head_in(wq) * scale          # fold softmax scale into q path
    wk_h = per_head_in(wk)
    wv_h = per_head_in(wv)
    bq_h = (bq * scale).reshape(H, 1, D)
    bk_h = bk.reshape(H, 1, D)
    bv_h = bv.reshape(H, 1, D)

    wo_h = jnp.transpose(wo).reshape(H, D, E)   # (H, D, E): W_o^T split by head
    bo_p = bo.reshape(1, E)
    if e_pad != E:                              # lane-dense output stores
        wo_h = jnp.pad(wo_h, ((0, 0), (0, 0), (0, e_pad - E)))
        bo_p = jnp.pad(bo_p, ((0, 0), (0, e_pad - E)))
    return wq_h, wk_h, wv_h, bq_h, bk_h, bv_h, wo_h, bo_p


def _choose_batch_block(N, L, S, E, e_pad, itemsize=4):
    """Batch elements per grid step: large enough to amortize per-step overhead,
    small enough for VMEM, and >=2 grid steps so both v7x TCs get work."""
    if N <= 1:
        return 1
    best = 1
    budget = 4 * 1024 * 1024          # double-buffered q/k/v/out block bytes
    for nb in range(1, min(N, 8) + 1):
        if N % nb:
            continue
        if N // nb < 2:               # keep megacore-friendly >=2 steps
            continue
        per_step = 2 * nb * (L * E + 2 * S * E + L * e_pad) * itemsize
        if per_step <= budget:
            best = nb
    return best


def cross_attention_pallas(query, key, value, params, num_heads):
    """query: (L, N, E), key/value: (S, N, E) -> (L, N, E), matching torch MHA."""
    L, N, E = query.shape
    S = key.shape[0]
    H = num_heads
    D = E // H
    e_pad = ((E + 127) // 128) * 128         # pad out-proj columns to full lanes

    # glue: batch-major layout for the kernel
    q_nb = jnp.transpose(query, (1, 0, 2))   # (N, L, E)
    k_nb = jnp.transpose(key, (1, 0, 2))     # (N, S, E)
    v_nb = jnp.transpose(value, (1, 0, 2))   # (N, S, E)

    wq_h, wk_h, wv_h, bq_h, bk_h, bv_h, wo_h, bo_p = _prep_params(params, H, e_pad)

    itemsize = query.dtype.itemsize
    nb = _choose_batch_block(N, L, S, E, e_pad, itemsize)
    grid = (N // nb,)

    resident = lambda shape: pl.BlockSpec(shape, lambda i: (0,) * len(shape))

    flops = 2 * N * (L * E * E + 2 * S * E * E + 2 * L * S * E + L * E * e_pad)
    transcendentals = N * H * L * (S + 1)
    bytes_accessed = itemsize * (
        N * (L * E + 2 * S * E + L * e_pad)
        + grid[0] * (3 * E * E + 3 * E + E * e_pad + e_pad))

    out_padded = pl.pallas_call(
        _mha_kernel,
        out_shape=jax.ShapeDtypeStruct((N, L, e_pad), query.dtype),
        grid_spec=pltpu.PrefetchScalarGridSpec(
            num_scalar_prefetch=0,
            grid=grid,
            in_specs=[
                pl.BlockSpec((nb, L, E), lambda i: (i, 0, 0)),   # q
                pl.BlockSpec((nb, S, E), lambda i: (i, 0, 0)),   # k
                pl.BlockSpec((nb, S, E), lambda i: (i, 0, 0)),   # v
                resident((H, E, D)),                             # Wq^T (scaled)
                resident((H, E, D)),                             # Wk^T
                resident((H, E, D)),                             # Wv^T
                resident((H, 1, D)),                             # bq (scaled)
                resident((H, 1, D)),                             # bk
                resident((H, 1, D)),                             # bv
                resident((H, D, e_pad)),                         # Wo^T (padded)
                resident((1, e_pad)),                            # bo (padded)
            ],
            out_specs=pl.BlockSpec((nb, L, e_pad), lambda i: (i, 0, 0)),
        ),
        compiler_params=pltpu.CompilerParams(
            dimension_semantics=("parallel",)),
        cost_estimate=pl.CostEstimate(
            flops=int(flops),
            transcendentals=int(transcendentals),
            bytes_accessed=int(bytes_accessed)),
    )(q_nb, k_nb, v_nb, wq_h, wk_h, wv_h, bq_h, bk_h, bv_h, wo_h, bo_p)

    out = out_padded[:, :, :E]               # drop lane padding
    return jnp.transpose(out, (1, 0, 2))     # back to (L, N, E)


def mha_reference(query, key, value, params, num_heads):
    """Pure-JAX reference mirroring torch.nn.MultiheadAttention forward."""
    wq, wk, wv, bq, bk, bv, wo, bo = params
    L, N, E = query.shape
    S = key.shape[0]
    D = E // num_heads

    qp = query @ wq.T + bq
    kp = key @ wk.T + bk
    vp = value @ wv.T + bv

    qh = qp.reshape(L, N, num_heads, D).transpose(1, 2, 0, 3)   # (N,H,L,D)
    kh = kp.reshape(S, N, num_heads, D).transpose(1, 2, 0, 3)   # (N,H,S,D)
    vh = vp.reshape(S, N, num_heads, D).transpose(1, 2, 0, 3)   # (N,H,S,D)

    scores = jnp.einsum('nhld,nhsd->nhls', qh, kh) / jnp.sqrt(D)
    probs = jax.nn.softmax(scores, axis=-1)
    o = jnp.einsum('nhls,nhsd->nhld', probs, vh)                # (N,H,L,D)
    o = o.transpose(2, 0, 1, 3).reshape(L, N, E)
    return o @ wo.T + bo


if __name__ == "__main__":
    # Small shapes consistent with MultiheadAttention(embed_dim, num_heads)
    embed_dim = 32
    num_heads = 8
    L, S, N = 8, 8, 2    # target seq len, source seq len, batch

    key0 = jax.random.PRNGKey(0)
    ks = jax.random.split(key0, 9)

    query = jax.random.normal(ks[0], (L, N, embed_dim), jnp.float32)
    keyt  = jax.random.normal(ks[1], (S, N, embed_dim), jnp.float32)
    value = jax.random.normal(ks[2], (S, N, embed_dim), jnp.float32)

    # Deterministic synthetic parameters (shapes match nn.MultiheadAttention:
    # in_proj_weight (3E,E) split into Wq/Wk/Wv, in_proj_bias (3E,),
    # out_proj.weight (E,E), out_proj.bias (E,)).
    scale = 0.05
    wq = scale * jax.random.normal(ks[3], (embed_dim, embed_dim), jnp.float32)
    wk = scale * jax.random.normal(ks[4], (embed_dim, embed_dim), jnp.float32)
    wv = scale * jax.random.normal(ks[5], (embed_dim, embed_dim), jnp.float32)
    bq = scale * jax.random.normal(ks[6], (embed_dim,), jnp.float32)
    bk = jnp.zeros((embed_dim,), jnp.float32)
    bv = scale * jax.random.normal(ks[7], (embed_dim,), jnp.float32)
    wo = scale * jax.random.normal(ks[8], (embed_dim, embed_dim), jnp.float32)
    bo = jnp.zeros((embed_dim,), jnp.float32)

    params = (wq, wk, wv, bq, bk, bv, wo, bo)

    out = cross_attention_pallas(query, keyt, value, params, num_heads)
    out = jax.block_until_ready(out)

    ref = mha_reference(query, keyt, value, params, num_heads)
    assert out.shape == (L, N, embed_dim)
    # approx=True softmax reciprocal -> slightly looser tolerance than exact path
    assert jnp.allclose(out, ref, atol=2e-3, rtol=2e-3), "mismatch vs reference"

    print("KERNEL_OK")
</pallas_src>

<mosaic_0001>
module attributes {stable_mosaic.version = 11 : i64} {
  func.func @_mha_kernel(%arg0: i32, %arg1: memref<1x8x32xf32, #tpu.memory_space<vmem>>, %arg2: memref<1x8x32xf32, #tpu.memory_space<vmem>>, %arg3: memref<1x8x32xf32, #tpu.memory_space<vmem>>, %arg4: memref<8x32x4xf32, #tpu.memory_space<vmem>>, %arg5: memref<8x32x4xf32, #tpu.memory_space<vmem>>, %arg6: memref<8x32x4xf32, #tpu.memory_space<vmem>>, %arg7: memref<8x1x4xf32, #tpu.memory_space<vmem>>, %arg8: memref<8x1x4xf32, #tpu.memory_space<vmem>>, %arg9: memref<8x1x4xf32, #tpu.memory_space<vmem>>, %arg10: memref<8x4x128xf32, #tpu.memory_space<vmem>>, %arg11: memref<1x128xf32, #tpu.memory_space<vmem>>, %arg12: memref<1x8x128xf32, #tpu.memory_space<vmem>>) attributes {dimension_semantics = [#tpu.dimension_semantics<parallel>], iteration_bounds = array<i64: 2>, scalar_prefetch = 0 : i64, scratch_operands = 0 : i64, tpu.core_type = #tpu.core_type<tc>, window_params = [{transform_indices = @transform_0, window_bounds = array<i64: 1, 8, 32>}, {transform_indices = @transform_1, window_bounds = array<i64: 1, 8, 32>}, {transform_indices = @transform_2, window_bounds = array<i64: 1, 8, 32>}, {pipeline_mode = #tpu.pipeline_mode<synchronous>, transform_indices = @transform_3, window_bounds = array<i64: 8, 32, 4>}, {pipeline_mode = #tpu.pipeline_mode<synchronous>, transform_indices = @transform_4, window_bounds = array<i64: 8, 32, 4>}, {pipeline_mode = #tpu.pipeline_mode<synchronous>, transform_indices = @transform_5, window_bounds = array<i64: 8, 32, 4>}, {pipeline_mode = #tpu.pipeline_mode<synchronous>, transform_indices = @transform_6, window_bounds = array<i64: 8, 1, 4>}, {pipeline_mode = #tpu.pipeline_mode<synchronous>, transform_indices = @transform_7, window_bounds = array<i64: 8, 1, 4>}, {pipeline_mode = #tpu.pipeline_mode<synchronous>, transform_indices = @transform_8, window_bounds = array<i64: 8, 1, 4>}, {pipeline_mode = #tpu.pipeline_mode<synchronous>, transform_indices = @transform_9, window_bounds = array<i64: 8, 4, 128>}, {pipeline_mode = #tpu.pipeline_mode<synchronous>, transform_indices = @transform_10, window_bounds = array<i64: 1, 128>}, {transform_indices = @transform_11, window_bounds = array<i64: 1, 8, 128>}]} {
    %c0 = arith.constant 0 : index
    %c0_0 = arith.constant 0 : index
    %c0_1 = arith.constant 0 : index
    %0 = vector.load %arg4[%c0, %c0_0, %c0_1] : memref<8x32x4xf32, #tpu.memory_space<vmem>>, vector<8x32x4xf32>
    %c0_2 = arith.constant 0 : index
    %c0_3 = arith.constant 0 : index
    %c0_4 = arith.constant 0 : index
    %1 = vector.load %arg5[%c0_2, %c0_3, %c0_4] : memref<8x32x4xf32, #tpu.memory_space<vmem>>, vector<8x32x4xf32>
    %c0_5 = arith.constant 0 : index
    %c0_6 = arith.constant 0 : index
    %c0_7 = arith.constant 0 : index
    %2 = vector.load %arg6[%c0_5, %c0_6, %c0_7] : memref<8x32x4xf32, #tpu.memory_space<vmem>>, vector<8x32x4xf32>
    %c0_8 = arith.constant 0 : index
    %c0_9 = arith.constant 0 : index
    %c0_10 = arith.constant 0 : index
    %3 = vector.load %arg7[%c0_8, %c0_9, %c0_10] : memref<8x1x4xf32, #tpu.memory_space<vmem>>, vector<8x1x4xf32>
    %c0_11 = arith.constant 0 : index
    %c0_12 = arith.constant 0 : index
    %c0_13 = arith.constant 0 : index
    %4 = vector.load %arg8[%c0_11, %c0_12, %c0_13] : memref<8x1x4xf32, #tpu.memory_space<vmem>>, vector<8x1x4xf32>
    %c0_14 = arith.constant 0 : index
    %c0_15 = arith.constant 0 : index
    %c0_16 = arith.constant 0 : index
    %5 = vector.load %arg9[%c0_14, %c0_15, %c0_16] : memref<8x1x4xf32, #tpu.memory_space<vmem>>, vector<8x1x4xf32>
    %c0_17 = arith.constant 0 : index
    %c0_18 = arith.constant 0 : index
    %c0_19 = arith.constant 0 : index
    %6 = vector.load %arg10[%c0_17, %c0_18, %c0_19] : memref<8x4x128xf32, #tpu.memory_space<vmem>>, vector<8x4x128xf32>
    %c0_20 = arith.constant 0 : index
    %c0_21 = arith.constant 0 : index
    %7 = vector.load %arg11[%c0_20, %c0_21] : memref<1x128xf32, #tpu.memory_space<vmem>>, vector<1x128xf32>
    %c0_22 = arith.constant 0 : index
    %c0_23 = arith.constant 0 : index
    %c0_24 = arith.constant 0 : index
    %8 = vector.load %arg1[%c0_22, %c0_23, %c0_24] : memref<1x8x32xf32, #tpu.memory_space<vmem>>, vector<1x8x32xf32>
    %9 = vector.shape_cast %8 : vector<1x8x32xf32> to vector<8x32xf32>
    %10 = vector.shape_cast %9 : vector<8x32xf32> to vector<1x8x32xf32>
    %11 = vector.shape_cast %10 : vector<1x8x32xf32> to vector<1x8x32xf32>
    %12 = vector.broadcast %11 : vector<1x8x32xf32> to vector<8x8x32xf32>
    %c0_25 = arith.constant 0 : index
    %c0_26 = arith.constant 0 : index
    %c0_27 = arith.constant 0 : index
    %13 = vector.load %arg2[%c0_25, %c0_26, %c0_27] : memref<1x8x32xf32, #tpu.memory_space<vmem>>, vector<1x8x32xf32>
    %14 = vector.shape_cast %13 : vector<1x8x32xf32> to vector<8x32xf32>
    %15 = vector.shape_cast %14 : vector<8x32xf32> to vector<1x8x32xf32>
    %16 = vector.shape_cast %15 : vector<1x8x32xf32> to vector<1x8x32xf32>
    %17 = vector.broadcast %16 : vector<1x8x32xf32> to vector<8x8x32xf32>
    %c0_28 = arith.constant 0 : index
    %c0_29 = arith.constant 0 : index
    %c0_30 = arith.constant 0 : index
    %18 = vector.load %arg3[%c0_28, %c0_29, %c0_30] : memref<1x8x32xf32, #tpu.memory_space<vmem>>, vector<1x8x32xf32>
    %19 = vector.shape_cast %18 : vector<1x8x32xf32> to vector<8x32xf32>
    %20 = vector.shape_cast %19 : vector<8x32xf32> to vector<1x8x32xf32>
    %21 = vector.shape_cast %20 : vector<1x8x32xf32> to vector<1x8x32xf32>
    %22 = vector.broadcast %21 : vector<1x8x32xf32> to vector<8x8x32xf32>
    "tpu.trace_start"() <{level = 10 : i32, message = "hle,hed->hld"}> : () -> ()
    %cst = arith.constant dense<0.000000e+00> : vector<8x8x4xf32>
    %23 = tpu.matmul %12, %0, %cst {dimension_numbers = #tpu.dot_dimension_numbers<[2], [1], [1], [2], [0, 0, 0, 1, 1, 2], [0], [0]>} : vector<8x8x32xf32>, vector<8x32x4xf32>, vector<8x8x4xf32> -> vector<8x8x4xf32>
    "tpu.trace_stop"() : () -> ()
    %24 = vector.broadcast %3 : vector<8x1x4xf32> to vector<8x8x4xf32>
    %25 = arith.addf %23, %24 : vector<8x8x4xf32>
    "tpu.trace_start"() <{level = 10 : i32, message = "hse,hed->hsd"}> : () -> ()
    %cst_31 = arith.constant dense<0.000000e+00> : vector<8x8x4xf32>
    %26 = tpu.matmul %17, %1, %cst_31 {dimension_numbers = #tpu.dot_dimension_numbers<[2], [1], [1], [2], [0, 0, 0, 1, 1, 2], [0], [0]>} : vector<8x8x32xf32>, vector<8x32x4xf32>, vector<8x8x4xf32> -> vector<8x8x4xf32>
    "tpu.trace_stop"() : () -> ()
    %27 = vector.broadcast %4 : vector<8x1x4xf32> to vector<8x8x4xf32>
    %28 = arith.addf %26, %27 : vector<8x8x4xf32>
    "tpu.trace_start"() <{level = 10 : i32, message = "hse,hed->hsd"}> : () -> ()
    %cst_32 = arith.constant dense<0.000000e+00> : vector<8x8x4xf32>
    %29 = tpu.matmul %22, %2, %cst_32 {dimension_numbers = #tpu.dot_dimension_numbers<[2], [1], [1], [2], [0, 0, 0, 1, 1, 2], [0], [0]>} : vector<8x8x32xf32>, vector<8x32x4xf32>, vector<8x8x4xf32> -> vector<8x8x4xf32>
    "tpu.trace_stop"() : () -> ()
    %30 = vector.broadcast %5 : vector<8x1x4xf32> to vector<8x8x4xf32>
    %31 = arith.addf %29, %30 : vector<8x8x4xf32>
    "tpu.trace_start"() <{level = 10 : i32, message = "hld,hsd->hls"}> : () -> ()
    %cst_33 = arith.constant dense<0.000000e+00> : vector<8x8x8xf32>
    %32 = tpu.matmul %25, %28, %cst_33 {dimension_numbers = #tpu.dot_dimension_numbers<[2], [2], [1], [1], [0, 0, 0, 1, 1, 1], [0], [0]>} : vector<8x8x4xf32>, vector<8x8x4xf32>, vector<8x8x8xf32> -> vector<8x8x8xf32>
    "tpu.trace_stop"() : () -> ()
    %cst_34 = arith.constant dense<0xFF800000> : vector<8x8xf32>
    %33 = vector.multi_reduction <maximumf>, %32, %cst_34 [2] : vector<8x8x8xf32> to vector<8x8xf32>
    %34 = vector.shape_cast %33 : vector<8x8xf32> to vector<8x8x1xf32>
    %35 = vector.broadcast %34 : vector<8x8x1xf32> to vector<8x8x8xf32>
    %36 = arith.subf %32, %35 : vector<8x8x8xf32>
    %37 = math.exp %36 : vector<8x8x8xf32>
    %cst_35 = arith.constant dense<0.000000e+00> : vector<8x8xf32>
    %38 = vector.multi_reduction <add>, %37, %cst_35 [2] : vector<8x8x8xf32> to vector<8x8xf32>
    %39 = vector.shape_cast %38 : vector<8x8xf32> to vector<8x8x1xf32>
    %40 = tpu.reciprocal %39 {approx = true} : vector<8x8x1xf32> -> vector<8x8x1xf32>
    %41 = vector.broadcast %40 : vector<8x8x1xf32> to vector<8x8x8xf32>
    %42 = arith.mulf %37, %41 : vector<8x8x8xf32>
    "tpu.trace_start"() <{level = 10 : i32, message = "hls,hsd->hld"}> : () -> ()
    %cst_36 = arith.constant dense<0.000000e+00> : vector<8x8x4xf32>
    %43 = tpu.matmul %42, %31, %cst_36 {dimension_numbers = #tpu.dot_dimension_numbers<[2], [1], [1], [2], [0, 0, 0, 1, 1, 2], [0], [0]>} : vector<8x8x8xf32>, vector<8x8x4xf32>, vector<8x8x4xf32> -> vector<8x8x4xf32>
    "tpu.trace_stop"() : () -> ()
    "tpu.trace_start"() <{level = 10 : i32, message = "hld,hde->hle"}> : () -> ()
    %cst_37 = arith.constant dense<0.000000e+00> : vector<8x8x128xf32>
    %44 = tpu.matmul %43, %6, %cst_37 {dimension_numbers = #tpu.dot_dimension_numbers<[2], [1], [1], [2], [0, 0, 0, 1, 1, 2], [0], [0]>} : vector<8x8x4xf32>, vector<8x4x128xf32>, vector<8x8x128xf32> -> vector<8x8x128xf32>
    "tpu.trace_stop"() : () -> ()
    %cst_38 = arith.constant dense<0.000000e+00> : vector<8x128xf32>
    %45 = vector.multi_reduction <add>, %44, %cst_38 [0] : vector<8x8x128xf32> to vector<8x128xf32>
    %46 = vector.broadcast %7 : vector<1x128xf32> to vector<8x128xf32>
    %47 = arith.addf %45, %46 : vector<8x128xf32>
    %c0_39 = arith.constant 0 : index
    %c0_40 = arith.constant 0 : index
    %c0_41 = arith.constant 0 : index
    %48 = vector.load %arg12[%c0_39, %c0_40, %c0_41] : memref<1x8x128xf32, #tpu.memory_space<vmem>>, vector<1x8x128xf32>
    %49 = vector.shape_cast %48 : vector<1x8x128xf32> to vector<8x128xf32>
    %50 = vector.shape_cast %47 : vector<8x128xf32> to vector<1x8x128xf32>
    tpu.vector_store %arg12[%c0_39, %c0_40, %c0_41], %50 {strides = array<i32>} : memref<1x8x128xf32, #tpu.memory_space<vmem>>, vector<1x8x128xf32>,
    return
  }
  func.func @transform_0(%arg0: i32) -> (i32, i32, i32) {
    %c0_i32 = arith.constant 0 : i32
    %c0_i32_0 = arith.constant 0 : i32
    %c0_i32_1 = arith.constant 0 : i32
    return %arg0, %c0_i32, %c0_i32_0 : i32, i32, i32
  }
  func.func @transform_1(%arg0: i32) -> (i32, i32, i32) {
    %c0_i32 = arith.constant 0 : i32
    %c0_i32_0 = arith.constant 0 : i32
    %c0_i32_1 = arith.constant 0 : i32
    return %arg0, %c0_i32, %c0_i32_0 : i32, i32, i32
  }
  func.func @transform_2(%arg0: i32) -> (i32, i32, i32) {
    %c0_i32 = arith.constant 0 : i32
    %c0_i32_0 = arith.constant 0 : i32
    %c0_i32_1 = arith.constant 0 : i32
    return %arg0, %c0_i32, %c0_i32_0 : i32, i32, i32
  }
  func.func @transform_3(%arg0: i32) -> (i32, i32, i32) {
    %c0_i32 = arith.constant 0 : i32
    %c0_i32_0 = arith.constant 0 : i32
    %c0_i32_1 = arith.constant 0 : i32
    %c0_i32_2 = arith.constant 0 : i32
    return %c0_i32, %c0_i32_0, %c0_i32_1 : i32, i32, i32
  }
  func.func @transform_4(%arg0: i32) -> (i32, i32, i32) {
    %c0_i32 = arith.constant 0 : i32
    %c0_i32_0 = arith.constant 0 : i32
    %c0_i32_1 = arith.constant 0 : i32
    %c0_i32_2 = arith.constant 0 : i32
    return %c0_i32, %c0_i32_0, %c0_i32_1 : i32, i32, i32
  }
  func.func @transform_5(%arg0: i32) -> (i32, i32, i32) {
    %c0_i32 = arith.constant 0 : i32
    %c0_i32_0 = arith.constant 0 : i32
    %c0_i32_1 = arith.constant 0 : i32
    %c0_i32_2 = arith.constant 0 : i32
    return %c0_i32, %c0_i32_0, %c0_i32_1 : i32, i32, i32
  }
  func.func @transform_6(%arg0: i32) -> (i32, i32, i32) {
    %c0_i32 = arith.constant 0 : i32
    %c0_i32_0 = arith.constant 0 : i32
    %c0_i32_1 = arith.constant 0 : i32
    %c0_i32_2 = arith.constant 0 : i32
    return %c0_i32, %c0_i32_0, %c0_i32_1 : i32, i32, i32
  }
  func.func @transform_7(%arg0: i32) -> (i32, i32, i32) {
    %c0_i32 = arith.constant 0 : i32
    %c0_i32_0 = arith.constant 0 : i32
    %c0_i32_1 = arith.constant 0 : i32
    %c0_i32_2 = arith.constant 0 : i32
    return %c0_i32, %c0_i32_0, %c0_i32_1 : i32, i32, i32
  }
  func.func @transform_8(%arg0: i32) -> (i32, i32, i32) {
    %c0_i32 = arith.constant 0 : i32
    %c0_i32_0 = arith.constant 0 : i32
    %c0_i32_1 = arith.constant 0 : i32
    %c0_i32_2 = arith.constant 0 : i32
    return %c0_i32, %c0_i32_0, %c0_i32_1 : i32, i32, i32
  }
  func.func @transform_9(%arg0: i32) -> (i32, i32, i32) {
    %c0_i32 = arith.constant 0 : i32
    %c0_i32_0 = arith.constant 0 : i32
    %c0_i32_1 = arith.constant 0 : i32
    %c0_i32_2 = arith.constant 0 : i32
    return %c0_i32, %c0_i32_0, %c0_i32_1 : i32, i32, i32
  }
  func.func @transform_10(%arg0: i32) -> (i32, i32) {
    %c0_i32 = arith.constant 0 : i32
    %c0_i32_0 = arith.constant 0 : i32
    %c0_i32_1 = arith.constant 0 : i32
    return %c0_i32, %c0_i32_0 : i32, i32
  }
  func.func @transform_11(%arg0: i32) -> (i32, i32, i32) {
    %c0_i32 = arith.constant 0 : i32
    %c0_i32_0 = arith.constant 0 : i32
    %c0_i32_1 = arith.constant 0 : i32
    return %arg0, %c0_i32, %c0_i32_0 : i32, i32, i32
  }
}

</mosaic_0001>

<llo_original>
// kernel: tpu_custom_call.1
$region0: #{tpu_custom_call.1}
  #allocation0 [shape = 'u32[]', space=smem, size = 0x4, offset = 0x4, fixed_abs, tag = 'smem constant byte address 0x4 - core index']
  #allocation1 [shape = 'u32[72,128]{1,0:T(1,128)}', space=vmem, size = 0x9000, scoped, tag = 'internal scratch']
  %s0 = inlined_call_operand.vmem [shape: f32[2,8,32], index: 0, kind: input, shape index: {}]
  %s1 = inlined_call_operand.vmem [shape: f32[2,8,32], index: 1, kind: input, shape index: {}]
  %s2 = inlined_call_operand.vmem [shape: f32[2,8,32], index: 2, kind: input, shape index: {}]
  %s3 = inlined_call_operand.vmem [shape: f32[8,32,4], index: 3, kind: input, shape index: {}]
  %s4 = inlined_call_operand.vmem [shape: f32[8,32,4], index: 4, kind: input, shape index: {}]
  %s5 = inlined_call_operand.vmem [shape: f32[8,32,4], index: 5, kind: input, shape index: {}]
  %s6 = inlined_call_operand.vmem [shape: f32[8,1,4], index: 6, kind: input, shape index: {}]
  %s7 = inlined_call_operand.vmem [shape: f32[8,1,4], index: 7, kind: input, shape index: {}]
  %s8 = inlined_call_operand.vmem [shape: f32[8,1,4], index: 8, kind: input, shape index: {}]
  %s9 = inlined_call_operand.vmem [shape: f32[8,4,128], index: 9, kind: input, shape index: {}]
  %s10 = inlined_call_operand.vmem [shape: f32[1,128], index: 10, kind: input, shape index: {}]
  %s11 = inlined_call_operand.hbm [shape: f32[2,8,128], index: 11, kind: output, shape index: {}]
  %s12 = sld [smem:[#allocation0]]
  $region77: #{tpu_custom_call.1} parent=0
    _
  %s14 = ssub.s32 1, %s12
  %s15 = scalar_select 0, %s14, %s12
  $region1: #{tpu_custom_call.1} parent=0
    #allocation2 [shape = 'u8[8192]{0}', space=vmem, size = 0x2000, scoped, tag = 'output window, operand 0']
    #allocation3 [shape = 's32[2]{0}', space=sflag, size = 0x8, scoped, tag = 'scoped memory for tpu_custom_call.1']
    %16 = vsyncpa [#allocation3], 0
    %s17 = scalar_lea.sflag [#allocation3], 1
    %18 = vsyncpa %s17, 0
    loop: start=0, step=1, limit=4
    $region2: #{tpu_custom_call.1} parent=1 // loop_pre_header
      _
    $region3: #{tpu_custom_call.1} parent=1 // loop_header
      %s20 = sphi 0, %s24
      %p21 = scmp.ge.s32.totalorder %s20, 4
      %s30 = sphi 0, %s32
      %s33 = sphi 0, %s30
      %s34 = sphi 0, %s33
      %s50 = sphi 0, %s34
      %s56 = sphi 0, %s58
      %s59 = sphi 0, %s56
      %s60 = sphi 0, %s59
      %s76 = sphi 0, %s60
      %s82 = sphi 0, %s84
      %s85 = sphi 0, %s82
      %s86 = sphi 0, %s85
      %s102 = sphi 0, %s86
      %s106 = sphi 0, %s106
      %s108 = sphi 0, %s106
      %s109 = sphi 0, %s108
      %s123 = sphi 0, %s109
      %s127 = sphi 0, %s127
      %s129 = sphi 0, %s127
      %s130 = sphi 0, %s129
      %s144 = sphi 0, %s130
      %s148 = sphi 0, %s148
      %s150 = sphi 0, %s148
      %s151 = sphi 0, %s150
      %s165 = sphi 0, %s151
      %s169 = sphi 0, %s169
      %s171 = sphi 0, %s169
      %s172 = sphi 0, %s171
      %s186 = sphi 0, %s172
      %s190 = sphi 0, %s190
      %s192 = sphi 0, %s190
      %s193 = sphi 0, %s192
      %s207 = sphi 0, %s193
      %s211 = sphi 0, %s211
      %s213 = sphi 0, %s211
      %s214 = sphi 0, %s213
      %s228 = sphi 0, %s214
      %s232 = sphi 0, %s232
      %s234 = sphi 0, %s232
      %s235 = sphi 0, %s234
      %s249 = sphi 0, %s235
      %s253 = sphi 0, %s253
      %s255 = sphi 0, %s253
      %s256 = sphi 0, %s255
      %s270 = sphi 0, %s256
      %s276 = sphi 0, %s278
      %s279 = sphi 0, %s276
      %s280 = sphi 0, %s279
      %s296 = sphi 0, %s280
    $region4: #{tpu_custom_call.1} parent=1 // loop_header_branch
      %23 = sbr.rel (%p21) target = $region8
    $region5: #{tpu_custom_call.1} parent=1 // loop_body
      %s25 = ssub.s32 %s20, 1
      %s26 = ssub.s32 %s20, 2
      %s27 = sadd.s32 %s20, 1
      %s28 = ssub.s32 %s20, %s27
      %p29 = scmp.eq.s32.totalorder %s28, 0
      %s31 = sadd.s32 %s30, 1
      %s32 = scalar_select %p29, %s30, %s31
      %p35 = pneg %p29
      %p36 = scmp.eq.s32.totalorder %s20, 1
      %p37 = por %p35, %p36
      %p38 = scmp.ne.s32.totalorder %s30, %s33
      %p39 = scmp.eq.s32.totalorder %s20, 0
      %p40 = por %p38, %p39
      %p41 = scmp.ne.s32.totalorder %s30, %s33
      %p42 = scmp.eq.s32.totalorder %s25, 1
      %p43 = por %p41, %p42
      %p44 = scmp.ne.s32.totalorder %s33, %s34
      %p45 = scmp.eq.s32.totalorder %s25, 0
      %p46 = por %p44, %p45
      %p47 = scmp.ne.s32.totalorder %s33, %s34
      %p48 = scmp.eq.s32.totalorder %s26, 1
      %p49 = por %p47, %p48
      %p51 = scmp.ne.s32.totalorder %s34, %s50
      %p52 = scmp.eq.s32.totalorder %s26, 0
      %p53 = por %p51, %p52
      %s54 = ssub.s32 %s20, %s27
      %p55 = scmp.eq.s32.totalorder %s54, 0
      %s57 = sadd.s32 %s56, 1
      %s58 = scalar_select %p55, %s56, %s57
      %p61 = pneg %p55
      %p62 = scmp.eq.s32.totalorder %s20, 1
      %p63 = por %p61, %p62
      %p64 = scmp.ne.s32.totalorder %s56, %s59
      %p65 = scmp.eq.s32.totalorder %s20, 0
      %p66 = por %p64, %p65
      %p67 = scmp.ne.s32.totalorder %s56, %s59
      %p68 = scmp.eq.s32.totalorder %s25, 1
      %p69 = por %p67, %p68
      %p70 = scmp.ne.s32.totalorder %s59, %s60
      %p71 = scmp.eq.s32.totalorder %s25, 0
      %p72 = por %p70, %p71
      %p73 = scmp.ne.s32.totalorder %s59, %s60
      %p74 = scmp.eq.s32.totalorder %s26, 1
      %p75 = por %p73, %p74
      %p77 = scmp.ne.s32.totalorder %s60, %s76
      %p78 = scmp.eq.s32.totalorder %s26, 0
      %p79 = por %p77, %p78
      %s80 = ssub.s32 %s20, %s27
      %p81 = scmp.eq.s32.totalorder %s80, 0
      %s83 = sadd.s32 %s82, 1
      %s84 = scalar_select %p81, %s82, %s83
      %p87 = pneg %p81
      %p88 = scmp.eq.s32.totalorder %s20, 1
      %p89 = por %p87, %p88
      %p90 = scmp.ne.s32.totalorder %s82, %s85
      %p91 = scmp.eq.s32.totalorder %s20, 0
      %p92 = por %p90, %p91
      %p93 = scmp.ne.s32.totalorder %s82, %s85
      %p94 = scmp.eq.s32.totalorder %s25, 1
      %p95 = por %p93, %p94
      %p96 = scmp.ne.s32.totalorder %s85, %s86
      %p97 = scmp.eq.s32.totalorder %s25, 0
      %p98 = por %p96, %p97
      %p99 = scmp.ne.s32.totalorder %s85, %s86
      %p100 = scmp.eq.s32.totalorder %s26, 1
      %p101 = por %p99, %p100
      %p103 = scmp.ne.s32.totalorder %s86, %s102
      %p104 = scmp.eq.s32.totalorder %s26, 0
      %p105 = por %p103, %p104
      %s107 = sadd.s32 %s106, 1
      %p110 = scmp.eq.s32.totalorder %s20, 1
      %p111 = scmp.ne.s32.totalorder %s106, %s108
      %p112 = scmp.eq.s32.totalorder %s20, 0
      %p113 = por %p111, %p112
      %p114 = scmp.ne.s32.totalorder %s106, %s108
      %p115 = scmp.eq.s32.totalorder %s25, 1
      %p116 = por %p114, %p115
      %p117 = scmp.ne.s32.totalorder %s108, %s109
      %p118 = scmp.eq.s32.totalorder %s25, 0
      %p119 = por %p117, %p118
      %p120 = scmp.ne.s32.totalorder %s108, %s109
      %p121 = scmp.eq.s32.totalorder %s26, 1
      %p122 = por %p120, %p121
      %p124 = scmp.ne.s32.totalorder %s109, %s123
      %p125 = scmp.eq.s32.totalorder %s26, 0
      %p126 = por %p124, %p125
      %s128 = sadd.s32 %s127, 1
      %p131 = scmp.eq.s32.totalorder %s20, 1
      %p132 = scmp.ne.s32.totalorder %s127, %s129
      %p133 = scmp.eq.s32.totalorder %s20, 0
      %p134 = por %p132, %p133
      %p135 = scmp.ne.s32.totalorder %s127, %s129
      %p136 = scmp.eq.s32.totalorder %s25, 1
      %p137 = por %p135, %p136
      %p138 = scmp.ne.s32.totalorder %s129, %s130
      %p139 = scmp.eq.s32.totalorder %s25, 0
      %p140 = por %p138, %p139
      %p141 = scmp.ne.s32.totalorder %s129, %s130
      %p142 = scmp.eq.s32.totalorder %s26, 1
      %p143 = por %p141, %p142
      %p145 = scmp.ne.s32.totalorder %s130, %s144
      %p146 = scmp.eq.s32.totalorder %s26, 0
      %p147 = por %p145, %p146
      %s149 = sadd.s32 %s148, 1
      %p152 = scmp.eq.s32.totalorder %s20, 1
      %p153 = scmp.ne.s32.totalorder %s148, %s150
      %p154 = scmp.eq.s32.totalorder %s20, 0
      %p155 = por %p153, %p154
      %p156 = scmp.ne.s32.totalorder %s148, %s150
      %p157 = scmp.eq.s32.totalorder %s25, 1
      %p158 = por %p156, %p157
      %p159 = scmp.ne.s32.totalorder %s150, %s151
      %p160 = scmp.eq.s32.totalorder %s25, 0
      %p161 = por %p159, %p160
      %p162 = scmp.ne.s32.totalorder %s150, %s151
      %p163 = scmp.eq.s32.totalorder %s26, 1
      %p164 = por %p162, %p163
      %p166 = scmp.ne.s32.totalorder %s151, %s165
      %p167 = scmp.eq.s32.totalorder %s26, 0
      %p168 = por %p166, %p167
      %s170 = sadd.s32 %s169, 1
      %p173 = scmp.eq.s32.totalorder %s20, 1
      %p174 = scmp.ne.s32.totalorder %s169, %s171
      %p175 = scmp.eq.s32.totalorder %s20, 0
      %p176 = por %p174, %p175
      %p177 = scmp.ne.s32.totalorder %s169, %s171
      %p178 = scmp.eq.s32.totalorder %s25, 1
      %p179 = por %p177, %p178
      %p180 = scmp.ne.s32.totalorder %s171, %s172
      %p181 = scmp.eq.s32.totalorder %s25, 0
      %p182 = por %p180, %p181
      %p183 = scmp.ne.s32.totalorder %s171, %s172
      %p184 = scmp.eq.s32.totalorder %s26, 1
      %p185 = por %p183, %p184
      %p187 = scmp.ne.s32.totalorder %s172, %s186
      %p188 = scmp.eq.s32.totalorder %s26, 0
      %p189 = por %p187, %p188
      %s191 = sadd.s32 %s190, 1
      %p194 = scmp.eq.s32.totalorder %s20, 1
      %p195 = scmp.ne.s32.totalorder %s190, %s192
      %p196 = scmp.eq.s32.totalorder %s20, 0
      %p197 = por %p195, %p196
      %p198 = scmp.ne.s32.totalorder %s190, %s192
      %p199 = scmp.eq.s32.totalorder %s25, 1
      %p200 = por %p198, %p199
      %p201 = scmp.ne.s32.totalorder %s192, %s193
      %p202 = scmp.eq.s32.totalorder %s25, 0
      %p203 = por %p201, %p202
      %p204 = scmp.ne.s32.totalorder %s192, %s193
      %p205 = scmp.eq.s32.totalorder %s26, 1
      %p206 = por %p204, %p205
      %p208 = scmp.ne.s32.totalorder %s193, %s207
      %p209 = scmp.eq.s32.totalorder %s26, 0
      %p210 = por %p208, %p209
      %s212 = sadd.s32 %s211, 1
      %p215 = scmp.eq.s32.totalorder %s20, 1
      %p216 = scmp.ne.s32.totalorder %s211, %s213
      %p217 = scmp.eq.s32.totalorder %s20, 0
      %p218 = por %p216, %p217
      %p219 = scmp.ne.s32.totalorder %s211, %s213
      %p220 = scmp.eq.s32.totalorder %s25, 1
      %p221 = por %p219, %p220
      %p222 = scmp.ne.s32.totalorder %s213, %s214
      %p223 = scmp.eq.s32.totalorder %s25, 0
      %p224 = por %p222, %p223
      %p225 = scmp.ne.s32.totalorder %s213, %s214
      %p226 = scmp.eq.s32.totalorder %s26, 1
      %p227 = por %p225, %p226
      %p229 = scmp.ne.s32.totalorder %s214, %s228
      %p230 = scmp.eq.s32.totalorder %s26, 0
      %p231 = por %p229, %p230
      %s233 = sadd.s32 %s232, 1
      %p236 = scmp.eq.s32.totalorder %s20, 1
      %p237 = scmp.ne.s32.totalorder %s232, %s234
      %p238 = scmp.eq.s32.totalorder %s20, 0
      %p239 = por %p237, %p238
      %p240 = scmp.ne.s32.totalorder %s232, %s234
      %p241 = scmp.eq.s32.totalorder %s25, 1
      %p242 = por %p240, %p241
      %p243 = scmp.ne.s32.totalorder %s234, %s235
      %p244 = scmp.eq.s32.totalorder %s25, 0
      %p245 = por %p243, %p244
      %p246 = scmp.ne.s32.totalorder %s234, %s235
      %p247 = scmp.eq.s32.totalorder %s26, 1
      %p248 = por %p246, %p247
      %p250 = scmp.ne.s32.totalorder %s235, %s249
      %p251 = scmp.eq.s32.totalorder %s26, 0
      %p252 = por %p250, %p251
      %s254 = sadd.s32 %s253, 1
      %p257 = scmp.eq.s32.totalorder %s20, 1
      %p258 = scmp.ne.s32.totalorder %s253, %s255
      %p259 = scmp.eq.s32.totalorder %s20, 0
      %p260 = por %p258, %p259
      %p261 = scmp.ne.s32.totalorder %s253, %s255
      %p262 = scmp.eq.s32.totalorder %s25, 1
      %p263 = por %p261, %p262
      %p264 = scmp.ne.s32.totalorder %s255, %s256
      %p265 = scmp.eq.s32.totalorder %s25, 0
      %p266 = por %p264, %p265
      %p267 = scmp.ne.s32.totalorder %s255, %s256
      %p268 = scmp.eq.s32.totalorder %s26, 1
      %p269 = por %p267, %p268
      %p271 = scmp.ne.s32.totalorder %s256, %s270
      %p272 = scmp.eq.s32.totalorder %s26, 0
      %p273 = por %p271, %p272
      %s274 = ssub.s32 %s20, %s27
      %p275 = scmp.eq.s32.totalorder %s274, 0
      %s277 = sadd.s32 %s276, 1
      %s278 = scalar_select %p275, %s276, %s277
      %p281 = pneg %p275
      %p282 = scmp.eq.s32.totalorder %s20, 1
      %p283 = por %p281, %p282
      %p284 = scmp.ne.s32.totalorder %s276, %s279
      %p285 = scmp.eq.s32.totalorder %s20, 0
      %p286 = por %p284, %p285
      %p287 = scmp.ne.s32.totalorder %s276, %s279
      %p288 = scmp.eq.s32.totalorder %s25, 1
      %p289 = por %p287, %p288
      %p290 = scmp.ne.s32.totalorder %s279, %s280
      %p291 = scmp.eq.s32.totalorder %s25, 0
      %p292 = por %p290, %p291
      %p293 = scmp.ne.s32.totalorder %s279, %s280
      %p294 = scmp.eq.s32.totalorder %s26, 1
      %p295 = por %p293, %p294
      %p297 = scmp.ne.s32.totalorder %s280, %s296
      %p298 = scmp.eq.s32.totalorder %s26, 0
      %p299 = por %p297, %p298
      %p300 = scmp.le.s32.totalorder 1, %s20
      %p301 = scmp.lt.s32.totalorder %s20, 3
      %p302 = pnand %p300, %p301
      %p303 = pneg %p302
      // Predicated region
      $region9: #{tpu_custom_call.1} parent=5 // pred_check
        _
      $region10: #{tpu_custom_call.1} parent=5 // pred_check_branch
        %305 = sbr.rel (%p302) target = $region12
      $region11: #{tpu_custom_call.1} parent=5 // pred_region
        %s306 = ssub.s32 %s20, 1
        // Predicated region
        $region13: #{tpu_custom_call.1} parent=11 // pred_check
          %p307 = pneg %p119
        $region14: #{tpu_custom_call.1} parent=11 // pred_check_branch
          %309 = sbr.rel (%p307) target = $region16
        $region15: #{tpu_custom_call.1} parent=11 // pred_region
          _
        $region16: #{tpu_custom_call.1} parent=11 // pred_fallthru
          _
        // Predicated region
        $region17: #{tpu_custom_call.1} parent=11 // pred_check
          %p310 = pneg %p140
        $region18: #{tpu_custom_call.1} parent=11 // pred_check_branch
          %312 = sbr.rel (%p310) target = $region20
        $region19: #{tpu_custom_call.1} parent=11 // pred_region
          _
        $region20: #{tpu_custom_call.1} parent=11 // pred_fallthru
          _
        // Predicated region
        $region21: #{tpu_custom_call.1} parent=11 // pred_check
          %p313 = pneg %p161
        $region22: #{tpu_custom_call.1} parent=11 // pred_check_branch
          %315 = sbr.rel (%p313) target = $region24
        $region23: #{tpu_custom_call.1} parent=11 // pred_region
          _
        $region24: #{tpu_custom_call.1} parent=11 // pred_fallthru
          _
        // Predicated region
        $region25: #{tpu_custom_call.1} parent=11 // pred_check
          %p316 = pneg %p182
        $region26: #{tpu_custom_call.1} parent=11 // pred_check_branch
          %318 = sbr.rel (%p316) target = $region28
        $region27: #{tpu_custom_call.1} parent=11 // pred_region
          _
        $region28: #{tpu_custom_call.1} parent=11 // pred_fallthru
          _
        // Predicated region
        $region29: #{tpu_custom_call.1} parent=11 // pred_check
          %p319 = pneg %p203
        $region30: #{tpu_custom_call.1} parent=11 // pred_check_branch
          %321 = sbr.rel (%p319) target = $region32
        $region31: #{tpu_custom_call.1} parent=11 // pred_region
          _
        $region32: #{tpu_custom_call.1} parent=11 // pred_fallthru
          _
        // Predicated region
        $region33: #{tpu_custom_call.1} parent=11 // pred_check
          %p322 = pneg %p224
        $region34: #{tpu_custom_call.1} parent=11 // pred_check_branch
          %324 = sbr.rel (%p322) target = $region36
        $region35: #{tpu_custom_call.1} parent=11 // pred_region
          _
        $region36: #{tpu_custom_call.1} parent=11 // pred_fallthru
          _
        // Predicated region
        $region37: #{tpu_custom_call.1} parent=11 // pred_check
          %p325 = pneg %p245
        $region38: #{tpu_custom_call.1} parent=11 // pred_check_branch
          %327 = sbr.rel (%p325) target = $region40
        $region39: #{tpu_custom_call.1} parent=11 // pred_region
          _
        $region40: #{tpu_custom_call.1} parent=11 // pred_fallthru
          _
        // Predicated region
        $region41: #{tpu_custom_call.1} parent=11 // pred_check
          %p328 = pneg %p266
        $region42: #{tpu_custom_call.1} parent=11 // pred_check_branch
          %330 = sbr.rel (%p328) target = $region44
        $region43: #{tpu_custom_call.1} parent=11 // pred_region
          _
        $region44: #{tpu_custom_call.1} parent=11 // pred_fallthru
          _
      $region12: #{tpu_custom_call.1} parent=5 // pred_fallthru
        _
      %p331 = scmp.lt.s32.totalorder %s20, 2
      // Predicated region
      $region45: #{tpu_custom_call.1} parent=5 // pred_check
        %p332 = pneg %p331
      $region46: #{tpu_custom_call.1} parent=5 // pred_check_branch
        %334 = sbr.rel (%p332) target = $region48
      $region47: #{tpu_custom_call.1} parent=5 // pred_region
        // Predicated region
        $region49: #{tpu_custom_call.1} parent=47 // pred_check
          %p335 = pneg %p40
        $region50: #{tpu_custom_call.1} parent=47 // pred_check_branch
          %337 = sbr.rel (%p335) target = $region52
        $region51: #{tpu_custom_call.1} parent=47 // pred_region
          %p338 = scmp.lt.s32.totalorder %s20, 1
          %s339 = scalar_select %p338, %s20, 1
          %s340 = smul.addr %s339, 8
          %s341 = scalar_lea.vmem %s0, %s340
        $region52: #{tpu_custom_call.1} parent=47 // pred_fallthru
          _
        // Predicated region
        $region53: #{tpu_custom_call.1} parent=47 // pred_check
          %p342 = pneg %p66
        $region54: #{tpu_custom_call.1} parent=47 // pred_check_branch
          %344 = sbr.rel (%p342) target = $region56
        $region55: #{tpu_custom_call.1} parent=47 // pred_region
          %p345 = scmp.lt.s32.totalorder %s20, 1
          %s346 = scalar_select %p345, %s20, 1
          %s347 = smul.addr %s346, 8
          %s348 = scalar_lea.vmem %s1, %s347
        $region56: #{tpu_custom_call.1} parent=47 // pred_fallthru
          _
        // Predicated region
        $region57: #{tpu_custom_call.1} parent=47 // pred_check
          %p349 = pneg %p92
        $region58: #{tpu_custom_call.1} parent=47 // pred_check_branch
          %351 = sbr.rel (%p349) target = $region60
        $region59: #{tpu_custom_call.1} parent=47 // pred_region
          %p352 = scmp.lt.s32.totalorder %s20, 1
          %s353 = scalar_select %p352, %s20, 1
          %s354 = smul.addr %s353, 8
          %s355 = scalar_lea.vmem %s2, %s354
        $region60: #{tpu_custom_call.1} parent=47 // pred_fallthru
          _
      $region48: #{tpu_custom_call.1} parent=5 // pred_fallthru
        _
      %p356 = scmp.le.s32.totalorder 1, %s20
      %p357 = scmp.lt.s32.totalorder %s20, 3
      %p358 = pnand %p356, %p357
      %p359 = pneg %p358
      // Predicated region
      $region61: #{tpu_custom_call.1} parent=5 // pred_check
        _
      $region62: #{tpu_custom_call.1} parent=5 // pred_check_branch
        %361 = sbr.rel (%p358) target = $region64
      $region63: #{tpu_custom_call.1} parent=5 // pred_region
        %s362 = ssub.s32 %s20, 1
        %p363 = scmp.lt.s32.totalorder %s25, 1
        %s364 = scalar_select %p363, %s25, 1
        %s365 = smul.addr %s364, 8
        %s366 = scalar_lea.vmem %s0, %s365
        %p367 = pneg %p46
        %p368 = pneg %p43
        %p369 = scmp.lt.s32.totalorder %s25, 1
        %s370 = scalar_select %p369, %s25, 1
        %s371 = smul.addr %s370, 8
        %s372 = scalar_lea.vmem %s1, %s371
        %p373 = pneg %p72
        %p374 = pneg %p69
        %p375 = scmp.lt.s32.totalorder %s25, 1
        %s376 = scalar_select %p375, %s25, 1
        %s377 = smul.addr %s376, 8
        %s378 = scalar_lea.vmem %s2, %s377
        %p379 = pneg %p98
        %p380 = pneg %p95
        %p381 = pneg %p119
        %p382 = pneg %p116
        %p383 = pneg %p140
        %p384 = pneg %p137
        %p385 = pneg %p161
        %p386 = pneg %p158
        %p387 = pneg %p182
        %p388 = pneg %p179
        %p389 = pneg %p203
        %p390 = pneg %p200
        %p391 = pneg %p224
        %p392 = pneg %p221
        %p393 = pneg %p245
        %p394 = pneg %p242
        %p395 = pneg %p266
        %p396 = pneg %p263
        %p397 = pneg %p292
        %p398 = pneg %p289
        %s399 = sand.u32 %s279, 1
        %s400 = scalar_lea.sflag [#allocation3], %s399
        %s401 = sand.u32 %s279, 1
        %s402 = smul.addr %s401, 8
        %s403 = scalar_lea.vmem [#allocation2], %s402
        %p404 = scmp.lt.s32.totalorder %s25, 1
        %s405 = scalar_select %p404, %s25, 1
        %s406 = smul.addr %s405, 8
        %s407 = scalar_lea.vmem %s0, %s406
        %p408 = scmp.lt.s32.totalorder %s25, 1
        %s409 = scalar_select %p408, %s25, 1
        %s410 = smul.addr %s409, 8
        %s411 = scalar_lea.vmem %s1, %s410
        %p412 = scmp.lt.s32.totalorder %s25, 1
        %s413 = scalar_select %p412, %s25, 1
        %s414 = smul.addr %s413, 8
        %s415 = scalar_lea.vmem %s2, %s414
        %v416 = vld [vmem:[%s3] sm:$0xff]
        %v417 = vld [vmem:[%s3 + $0x8] sm:$0xff]
        %v418 = vld [vmem:[%s3 + $0x10] sm:$0xff]
        %v419 = vld [vmem:[%s3 + $0x18] sm:$0xff]
        %v420 = vld [vmem:[%s3 + $0x20] sm:$0xff]
        %v421 = vld [vmem:[%s3 + $0x28] sm:$0xff]
        %v422 = vld [vmem:[%s3 + $0x30] sm:$0xff]
        %v423 = vld [vmem:[%s3 + $0x38] sm:$0xff]
        %v424 = vld [vmem:[%s3 + $0x40] sm:$0xff]
        %v425 = vld [vmem:[%s3 + $0x48] sm:$0xff]
        %v426 = vld [vmem:[%s3 + $0x50] sm:$0xff]
        %v427 = vld [vmem:[%s3 + $0x58] sm:$0xff]
        %v428 = vld [vmem:[%s3 + $0x60] sm:$0xff]
        %v429 = vld [vmem:[%s3 + $0x68] sm:$0xff]
        %v430 = vld [vmem:[%s3 + $0x70] sm:$0xff]
        %v431 = vld [vmem:[%s3 + $0x78] sm:$0xff]
        %v432 = vld [vmem:[%s3 + $0x80] sm:$0xff]
        %v433 = vld [vmem:[%s3 + $0x88] sm:$0xff]
        %v434 = vld [vmem:[%s3 + $0x90] sm:$0xff]
        %v435 = vld [vmem:[%s3 + $0x98] sm:$0xff]
        %v436 = vld [vmem:[%s3 + $0xa0] sm:$0xff]
        %v437 = vld [vmem:[%s3 + $0xa8] sm:$0xff]
        %v438 = vld [vmem:[%s3 + $0xb0] sm:$0xff]
        %v439 = vld [vmem:[%s3 + $0xb8] sm:$0xff]
        %v440 = vld [vmem:[%s3 + $0xc0] sm:$0xff]
        %v441 = vld [vmem:[%s3 + $0xc8] sm:$0xff]
        %v442 = vld [vmem:[%s3 + $0xd0] sm:$0xff]
        %v443 = vld [vmem:[%s3 + $0xd8] sm:$0xff]
        %v444 = vld [vmem:[%s3 + $0xe0] sm:$0xff]
        %v445 = vld [vmem:[%s3 + $0xe8] sm:$0xff]
        %v446 = vld [vmem:[%s3 + $0xf0] sm:$0xff]
        %v447 = vld [vmem:[%s3 + $0xf8] sm:$0xff]
        %v448 = vld [vmem:[%s4] sm:$0xff]
        %v449 = vld [vmem:[%s4 + $0x8] sm:$0xff]
        %v450 = vld [vmem:[%s4 + $0x10] sm:$0xff]
        %v451 = vld [vmem:[%s4 + $0x18] sm:$0xff]
        %v452 = vld [vmem:[%s4 + $0x20] sm:$0xff]
        %v453 = vld [vmem:[%s4 + $0x28] sm:$0xff]
        %v454 = vld [vmem:[%s4 + $0x30] sm:$0xff]
        %v455 = vld [vmem:[%s4 + $0x38] sm:$0xff]
        %v456 = vld [vmem:[%s4 + $0x40] sm:$0xff]
        %v457 = vld [vmem:[%s4 + $0x48] sm:$0xff]
        %v458 = vld [vmem:[%s4 + $0x50] sm:$0xff]
        %v459 = vld [vmem:[%s4 + $0x58] sm:$0xff]
        %v460 = vld [vmem:[%s4 + $0x60] sm:$0xff]
        %v461 = vld [vmem:[%s4 + $0x68] sm:$0xff]
        %v462 = vld [vmem:[%s4 + $0x70] sm:$0xff]
        %v463 = vld [vmem:[%s4 + $0x78] sm:$0xff]
        %v464 = vld [vmem:[%s4 + $0x80] sm:$0xff]
        %v465 = vld [vmem:[%s4 + $0x88] sm:$0xff]
        %v466 = vld [vmem:[%s4 + $0x90] sm:$0xff]
        %v467 = vld [vmem:[%s4 + $0x98] sm:$0xff]
        %v468 = vld [vmem:[%s4 + $0xa0] sm:$0xff]
        %v469 = vld [vmem:[%s4 + $0xa8] sm:$0xff]
        %v470 = vld [vmem:[%s4 + $0xb0] sm:$0xff]
        %v471 = vld [vmem:[%s4 + $0xb8] sm:$0xff]
        %v472 = vld [vmem:[%s4 + $0xc0] sm:$0xff]
        %v473 = vld [vmem:[%s4 + $0xc8] sm:$0xff]
        %v474 = vld [vmem:[%s4 + $0xd0] sm:$0xff]
        %v475 = vld [vmem:[%s4 + $0xd8] sm:$0xff]
        %v476 = vld [vmem:[%s4 + $0xe0] sm:$0xff]
        %v477 = vld [vmem:[%s4 + $0xe8] sm:$0xff]
        %v478 = vld [vmem:[%s4 + $0xf0] sm:$0xff]
        %v479 = vld [vmem:[%s4 + $0xf8] sm:$0xff]
        %v480 = vld [vmem:[%s5] sm:$0xff]
        %v481 = vld [vmem:[%s5 + $0x8] sm:$0xff]
        %v482 = vld [vmem:[%s5 + $0x10] sm:$0xff]
        %v483 = vld [vmem:[%s5 + $0x18] sm:$0xff]
        %v484 = vld [vmem:[%s5 + $0x20] sm:$0xff]
        %v485 = vld [vmem:[%s5 + $0x28] sm:$0xff]
        %v486 = vld [vmem:[%s5 + $0x30] sm:$0xff]
        %v487 = vld [vmem:[%s5 + $0x38] sm:$0xff]
        %v488 = vld [vmem:[%s5 + $0x40] sm:$0xff]
        %v489 = vld [vmem:[%s5 + $0x48] sm:$0xff]
        %v490 = vld [vmem:[%s5 + $0x50] sm:$0xff]
        %v491 = vld [vmem:[%s5 + $0x58] sm:$0xff]
        %v492 = vld [vmem:[%s5 + $0x60] sm:$0xff]
        %v493 = vld [vmem:[%s5 + $0x68] sm:$0xff]
        %v494 = vld [vmem:[%s5 + $0x70] sm:$0xff]
        %v495 = vld [vmem:[%s5 + $0x78] sm:$0xff]
        %v496 = vld [vmem:[%s5 + $0x80] sm:$0xff]
        %v497 = vld [vmem:[%s5 + $0x88] sm:$0xff]
        %v498 = vld [vmem:[%s5 + $0x90] sm:$0xff]
        %v499 = vld [vmem:[%s5 + $0x98] sm:$0xff]
        %v500 = vld [vmem:[%s5 + $0xa0] sm:$0xff]
        %v501 = vld [vmem:[%s5 + $0xa8] sm:$0xff]
        %v502 = vld [vmem:[%s5 + $0xb0] sm:$0xff]
        %v503 = vld [vmem:[%s5 + $0xb8] sm:$0xff]
        %v504 = vld [vmem:[%s5 + $0xc0] sm:$0xff]
        %v505 = vld [vmem:[%s5 + $0xc8] sm:$0xff]
        %v506 = vld [vmem:[%s5 + $0xd0] sm:$0xff]
        %v507 = vld [vmem:[%s5 + $0xd8] sm:$0xff]
        %v508 = vld [vmem:[%s5 + $0xe0] sm:$0xff]
        %v509 = vld [vmem:[%s5 + $0xe8] sm:$0xff]
        %v510 = vld [vmem:[%s5 + $0xf0] sm:$0xff]
        %v511 = vld [vmem:[%s5 + $0xf8] sm:$0xff]
        %v512 = vld [vmem:[%s6] sm:$0x1]
        %v513 = vld [vmem:[%s6 + $0x1] sm:$0x1]
        %v514 = vld [vmem:[%s6 + $0x2] sm:$0x1]
        %v515 = vld [vmem:[%s6 + $0x3] sm:$0x1]
        %v516 = vld [vmem:[%s6 + $0x4] sm:$0x1]
        %v517 = vld [vmem:[%s6 + $0x5] sm:$0x1]
        %v518 = vld [vmem:[%s6 + $0x6] sm:$0x1]
        %v519 = vld [vmem:[%s6 + $0x7] sm:$0x1]
        %v520 = vld [vmem:[%s7] sm:$0x1]
        %v521 = vld [vmem:[%s7 + $0x1] sm:$0x1]
        %v522 = vld [vmem:[%s7 + $0x2] sm:$0x1]
        %v523 = vld [vmem:[%s7 + $0x3] sm:$0x1]
        %v524 = vld [vmem:[%s7 + $0x4] sm:$0x1]
        %v525 = vld [vmem:[%s7 + $0x5] sm:$0x1]
        %v526 = vld [vmem:[%s7 + $0x6] sm:$0x1]
        %v527 = vld [vmem:[%s7 + $0x7] sm:$0x1]
        %v528 = vld [vmem:[%s8] sm:$0x1]
        %v529 = vld [vmem:[%s8 + $0x1] sm:$0x1]
        %v530 = vld [vmem:[%s8 + $0x2] sm:$0x1]
        %v531 = vld [vmem:[%s8 + $0x3] sm:$0x1]
        %v532 = vld [vmem:[%s8 + $0x4] sm:$0x1]
        %v533 = vld [vmem:[%s8 + $0x5] sm:$0x1]
        %v534 = vld [vmem:[%s8 + $0x6] sm:$0x1]
        %v535 = vld [vmem:[%s8 + $0x7] sm:$0x1]
        %v536 = vld [vmem:[%s9] sm:$0xf]
        %v537 = vld [vmem:[%s9 + $0x4] sm:$0xf]
        %v538 = vld [vmem:[%s9 + $0x8] sm:$0xf]
        %v539 = vld [vmem:[%s9 + $0xc] sm:$0xf]
        %v540 = vld [vmem:[%s9 + $0x10] sm:$0xf]
        %v541 = vld [vmem:[%s9 + $0x14] sm:$0xf]
        %v542 = vld [vmem:[%s9 + $0x18] sm:$0xf]
        %v543 = vld [vmem:[%s9 + $0x1c] sm:$0xf]
        %v544 = vld [vmem:[%s10] sm:$0x1]
        %v545 = vld [vmem:[%s407] sm:$0xff]
        %v546 = vld [vmem:[%s411] sm:$0xff]
        %v547 = vld [vmem:[%s415] sm:$0xff]
        %v556 = vperm.slane %v512, 0
        %v557 = vperm.slane %v513, 0
        %v558 = vperm.slane %v514, 0
        %v559 = vperm.slane %v515, 0
        %v560 = vperm.slane %v516, 0
        %v561 = vperm.slane %v517, 0
        %v562 = vperm.slane %v518, 0
        %v563 = vperm.slane %v519, 0
        %vm572 = vcmask 261120
        %v574 = vsel %vm572, %v545, 0
        %576 = vmatpush.msra.mxu0 0.0
        %577 = vmatpush.msra.mxu0 0.0
        %578 = vmatpush.msra.mxu0 0.0
        %579 = vmatpush.msra.mxu0 0.0
        %580 = vmatpush.msra.mxu0 0.0
        %581 = vmatpush.msra.mxu0 0.0
        %582 = vmatpush.msra.mxu0 0.0
        %583 = vmatpush.msra.mxu0 0.0
        %584 = vmatpush.msra.mxu0 0.0
        %585 = vmatpush.msra.mxu0 0.0
        %586 = vmatpush.msra.mxu0 0.0
        %587 = vmatpush.msra.mxu0 0.0
        %588 = vmatpush.msra.mxu0 %v419
        %589 = vmatpush.msra.mxu0 %v418
        %590 = vmatpush.msra.mxu0 %v417
        %591 = vmatpush.msra.mxu0 %v416
        %592 = vmatmul.f32.gmra.mxu0 %v574
        %v593 = vpop.f32.mrf.mxu0
        %v594 = vadd.f32 %v556, %v593
        %595 = vdwg.mxu0
        %596 = vmatpush.msra.mxu0 0.0
        %597 = vmatpush.msra.mxu0 0.0
        %598 = vmatpush.msra.mxu0 0.0
        %599 = vmatpush.msra.mxu0 0.0
        %600 = vmatpush.msra.mxu0 0.0
        %601 = vmatpush.msra.mxu0 0.0
        %602 = vmatpush.msra.mxu0 0.0
        %603 = vmatpush.msra.mxu0 0.0
        %604 = vmatpush.msra.mxu0 0.0
        %605 = vmatpush.msra.mxu0 0.0
        %606 = vmatpush.msra.mxu0 0.0
        %607 = vmatpush.msra.mxu0 0.0
        %608 = vmatpush.msra.mxu0 %v423
        %609 = vmatpush.msra.mxu0 %v422
        %610 = vmatpush.msra.mxu0 %v421
        %611 = vmatpush.msra.mxu0 %v420
        %612 = vmatmul.f32.gmra.mxu0 %v574
        %v613 = vpop.f32.mrf.mxu0
        %v614 = vadd.f32 %v557, %v613
        %615 = vdwg.mxu0
        %616 = vmatpush.msra.mxu0 0.0
        %617 = vmatpush.msra.mxu0 0.0
        %618 = vmatpush.msra.mxu0 0.0
        %619 = vmatpush.msra.mxu0 0.0
        %620 = vmatpush.msra.mxu0 0.0
        %621 = vmatpush.msra.mxu0 0.0
        %622 = vmatpush.msra.mxu0 0.0
        %623 = vmatpush.msra.mxu0 0.0
        %624 = vmatpush.msra.mxu0 0.0
        %625 = vmatpush.msra.mxu0 0.0
        %626 = vmatpush.msra.mxu0 0.0
        %627 = vmatpush.msra.mxu0 0.0
        %628 = vmatpush.msra.mxu0 %v427
        %629 = vmatpush.msra.mxu0 %v426
        %630 = vmatpush.msra.mxu0 %v425
        %631 = vmatpush.msra.mxu0 %v424
        %632 = vmatmul.f32.gmra.mxu0 %v574
        %v633 = vpop.f32.mrf.mxu0
        %v634 = vadd.f32 %v558, %v633
        %635 = vdwg.mxu0
        %636 = vmatpush.msra.mxu0 0.0
        %637 = vmatpush.msra.mxu0 0.0
        %638 = vmatpush.msra.mxu0 0.0
        %639 = vmatpush.msra.mxu0 0.0
        %640 = vmatpush.msra.mxu0 0.0
        %641 = vmatpush.msra.mxu0 0.0
        %642 = vmatpush.msra.mxu0 0.0
        %643 = vmatpush.msra.mxu0 0.0
        %644 = vmatpush.msra.mxu0 0.0
        %645 = vmatpush.msra.mxu0 0.0
        %646 = vmatpush.msra.mxu0 0.0
        %647 = vmatpush.msra.mxu0 0.0
        %648 = vmatpush.msra.mxu0 %v431
        %649 = vmatpush.msra.mxu0 %v430
        %650 = vmatpush.msra.mxu0 %v429
        %651 = vmatpush.msra.mxu0 %v428
        %652 = vmatmul.f32.gmra.mxu0 %v574
        %v653 = vpop.f32.mrf.mxu0
        %v654 = vadd.f32 %v559, %v653
        %655 = vdwg.mxu0
        %656 = vmatpush.msra.mxu0 0.0
        %657 = vmatpush.msra.mxu0 0.0
        %658 = vmatpush.msra.mxu0 0.0
        %659 = vmatpush.msra.mxu0 0.0
        %660 = vmatpush.msra.mxu0 0.0
        %661 = vmatpush.msra.mxu0 0.0
        %662 = vmatpush.msra.mxu0 0.0
        %663 = vmatpush.msra.mxu0 0.0
        %664 = vmatpush.msra.mxu0 0.0
        %665 = vmatpush.msra.mxu0 0.0
        %666 = vmatpush.msra.mxu0 0.0
        %667 = vmatpush.msra.mxu0 0.0
        %668 = vmatpush.msra.mxu0 %v435
        %669 = vmatpush.msra.mxu0 %v434
        %670 = vmatpush.msra.mxu0 %v433
        %671 = vmatpush.msra.mxu0 %v432
        %672 = vmatmul.f32.gmra.mxu0 %v574
        %v673 = vpop.f32.mrf.mxu0
        %v674 = vadd.f32 %v560, %v673
        %675 = vdwg.mxu0
        %676 = vmatpush.msra.mxu0 0.0
        %677 = vmatpush.msra.mxu0 0.0
        %678 = vmatpush.msra.mxu0 0.0
        %679 = vmatpush.msra.mxu0 0.0
        %680 = vmatpush.msra.mxu0 0.0
        %681 = vmatpush.msra.mxu0 0.0
        %682 = vmatpush.msra.mxu0 0.0
        %683 = vmatpush.msra.mxu0 0.0
        %684 = vmatpush.msra.mxu0 0.0
        %685 = vmatpush.msra.mxu0 0.0
        %686 = vmatpush.msra.mxu0 0.0
        %687 = vmatpush.msra.mxu0 0.0
        %688 = vmatpush.msra.mxu0 %v439
        %689 = vmatpush.msra.mxu0 %v438
        %690 = vmatpush.msra.mxu0 %v437
        %691 = vmatpush.msra.mxu0 %v436
        %692 = vmatmul.f32.gmra.mxu0 %v574
        %v693 = vpop.f32.mrf.mxu0
        %v694 = vadd.f32 %v561, %v693
        %695 = vdwg.mxu0
        %696 = vmatpush.msra.mxu0 0.0
        %697 = vmatpush.msra.mxu0 0.0
        %698 = vmatpush.msra.mxu0 0.0
        %699 = vmatpush.msra.mxu0 0.0
        %700 = vmatpush.msra.mxu0 0.0
        %701 = vmatpush.msra.mxu0 0.0
        %702 = vmatpush.msra.mxu0 0.0
        %703 = vmatpush.msra.mxu0 0.0
        %704 = vmatpush.msra.mxu0 0.0
        %705 = vmatpush.msra.mxu0 0.0
        %706 = vmatpush.msra.mxu0 0.0
        %707 = vmatpush.msra.mxu0 0.0
        %708 = vmatpush.msra.mxu0 %v443
        %709 = vmatpush.msra.mxu0 %v442
        %710 = vmatpush.msra.mxu0 %v441
        %711 = vmatpush.msra.mxu0 %v440
        %712 = vmatmul.f32.gmra.mxu0 %v574
        %v713 = vpop.f32.mrf.mxu0
        %v714 = vadd.f32 %v562, %v713
        %715 = vdwg.mxu0
        %716 = vmatpush.msra.mxu0 0.0
        %717 = vmatpush.msra.mxu0 0.0
        %718 = vmatpush.msra.mxu0 0.0
        %719 = vmatpush.msra.mxu0 0.0
        %720 = vmatpush.msra.mxu0 0.0
        %721 = vmatpush.msra.mxu0 0.0
        %722 = vmatpush.msra.mxu0 0.0
        %723 = vmatpush.msra.mxu0 0.0
        %724 = vmatpush.msra.mxu0 0.0
        %725 = vmatpush.msra.mxu0 0.0
        %726 = vmatpush.msra.mxu0 0.0
        %727 = vmatpush.msra.mxu0 0.0
        %728 = vmatpush.msra.mxu0 %v447
        %729 = vmatpush.msra.mxu0 %v446
        %730 = vmatpush.msra.mxu0 %v445
        %731 = vmatpush.msra.mxu0 %v444
        %732 = vmatmul.f32.gmra.mxu0 %v574
        %v733 = vpop.f32.mrf.mxu0
        %v734 = vadd.f32 %v563, %v733
        %735 = vdwg.mxu0
        %v744 = vperm.slane %v520, 0
        %v745 = vperm.slane %v521, 0
        %v746 = vperm.slane %v522, 0
        %v747 = vperm.slane %v523, 0
        %v748 = vperm.slane %v524, 0
        %v749 = vperm.slane %v525, 0
        %v750 = vperm.slane %v526, 0
        %v751 = vperm.slane %v527, 0
        %v761 = vsel %vm572, %v546, 0
        %763 = vmatpush.msra.mxu0 0.0
        %764 = vmatpush.msra.mxu0 0.0
        %765 = vmatpush.msra.mxu0 0.0
        %766 = vmatpush.msra.mxu0 0.0
        %767 = vmatpush.msra.mxu0 0.0
        %768 = vmatpush.msra.mxu0 0.0
        %769 = vmatpush.msra.mxu0 0.0
        %770 = vmatpush.msra.mxu0 0.0
        %771 = vmatpush.msra.mxu0 0.0
        %772 = vmatpush.msra.mxu0 0.0
        %773 = vmatpush.msra.mxu0 0.0
        %774 = vmatpush.msra.mxu0 0.0
        %775 = vmatpush.msra.mxu0 %v451
        %776 = vmatpush.msra.mxu0 %v450
        %777 = vmatpush.msra.mxu0 %v449
        %778 = vmatpush.msra.mxu0 %v448
        %779 = vmatmul.f32.gmra.mxu0 %v761
        %v780 = vpop.f32.mrf.mxu0
        %v781 = vadd.f32 %v744, %v780
        %782 = vdwg.mxu0
        %783 = vmatpush.msra.mxu0 0.0
        %784 = vmatpush.msra.mxu0 0.0
        %785 = vmatpush.msra.mxu0 0.0
        %786 = vmatpush.msra.mxu0 0.0
        %787 = vmatpush.msra.mxu0 0.0
        %788 = vmatpush.msra.mxu0 0.0
        %789 = vmatpush.msra.mxu0 0.0
        %790 = vmatpush.msra.mxu0 0.0
        %791 = vmatpush.msra.mxu0 0.0
        %792 = vmatpush.msra.mxu0 0.0
        %793 = vmatpush.msra.mxu0 0.0
        %794 = vmatpush.msra.mxu0 0.0
        %795 = vmatpush.msra.mxu0 %v455
        %796 = vmatpush.msra.mxu0 %v454
        %797 = vmatpush.msra.mxu0 %v453
        %798 = vmatpush.msra.mxu0 %v452
        %799 = vmatmul.f32.gmra.mxu0 %v761
        %v800 = vpop.f32.mrf.mxu0
        %v801 = vadd.f32 %v745, %v800
        %802 = vdwg.mxu0
        %803 = vmatpush.msra.mxu0 0.0
        %804 = vmatpush.msra.mxu0 0.0
        %805 = vmatpush.msra.mxu0 0.0
        %806 = vmatpush.msra.mxu0 0.0
        %807 = vmatpush.msra.mxu0 0.0
        %808 = vmatpush.msra.mxu0 0.0
        %809 = vmatpush.msra.mxu0 0.0
        %810 = vmatpush.msra.mxu0 0.0
        %811 = vmatpush.msra.mxu0 0.0
        %812 = vmatpush.msra.mxu0 0.0
        %813 = vmatpush.msra.mxu0 0.0
        %814 = vmatpush.msra.mxu0 0.0
        %815 = vmatpush.msra.mxu0 %v459
        %816 = vmatpush.msra.mxu0 %v458
        %817 = vmatpush.msra.mxu0 %v457
        %818 = vmatpush.msra.mxu0 %v456
        %819 = vmatmul.f32.gmra.mxu0 %v761
        %v820 = vpop.f32.mrf.mxu0
        %v821 = vadd.f32 %v746, %v820
        %822 = vdwg.mxu0
        %823 = vmatpush.msra.mxu0 0.0
        %824 = vmatpush.msra.mxu0 0.0
        %825 = vmatpush.msra.mxu0 0.0
        %826 = vmatpush.msra.mxu0 0.0
        %827 = vmatpush.msra.mxu0 0.0
        %828 = vmatpush.msra.mxu0 0.0
        %829 = vmatpush.msra.mxu0 0.0
        %830 = vmatpush.msra.mxu0 0.0
        %831 = vmatpush.msra.mxu0 0.0
        %832 = vmatpush.msra.mxu0 0.0
        %833 = vmatpush.msra.mxu0 0.0
        %834 = vmatpush.msra.mxu0 0.0
        %835 = vmatpush.msra.mxu0 %v463
        %836 = vmatpush.msra.mxu0 %v462
        %837 = vmatpush.msra.mxu0 %v461
        %838 = vmatpush.msra.mxu0 %v460
        %839 = vmatmul.f32.gmra.mxu0 %v761
        %v840 = vpop.f32.mrf.mxu0
        %v841 = vadd.f32 %v747, %v840
        %842 = vdwg.mxu0
        %843 = vmatpush.msra.mxu0 0.0
        %844 = vmatpush.msra.mxu0 0.0
        %845 = vmatpush.msra.mxu0 0.0
        %846 = vmatpush.msra.mxu0 0.0
        %847 = vmatpush.msra.mxu0 0.0
        %848 = vmatpush.msra.mxu0 0.0
        %849 = vmatpush.msra.mxu0 0.0
        %850 = vmatpush.msra.mxu0 0.0
        %851 = vmatpush.msra.mxu0 0.0
        %852 = vmatpush.msra.mxu0 0.0
        %853 = vmatpush.msra.mxu0 0.0
        %854 = vmatpush.msra.mxu0 0.0
        %855 = vmatpush.msra.mxu0 %v467
        %856 = vmatpush.msra.mxu0 %v466
        %857 = vmatpush.msra.mxu0 %v465
        %858 = vmatpush.msra.mxu0 %v464
        %859 = vmatmul.f32.gmra.mxu0 %v761
        %v860 = vpop.f32.mrf.mxu0
        %v861 = vadd.f32 %v748, %v860
        %862 = vdwg.mxu0
        %863 = vmatpush.msra.mxu0 0.0
        %864 = vmatpush.msra.mxu0 0.0
        %865 = vmatpush.msra.mxu0 0.0
        %866 = vmatpush.msra.mxu0 0.0
        %867 = vmatpush.msra.mxu0 0.0
        %868 = vmatpush.msra.mxu0 0.0
        %869 = vmatpush.msra.mxu0 0.0
        %870 = vmatpush.msra.mxu0 0.0
        %871 = vmatpush.msra.mxu0 0.0
        %872 = vmatpush.msra.mxu0 0.0
        %873 = vmatpush.msra.mxu0 0.0
        %874 = vmatpush.msra.mxu0 0.0
        %875 = vmatpush.msra.mxu0 %v471
        %876 = vmatpush.msra.mxu0 %v470
        %877 = vmatpush.msra.mxu0 %v469
        %878 = vmatpush.msra.mxu0 %v468
        %879 = vmatmul.f32.gmra.mxu0 %v761
        %v880 = vpop.f32.mrf.mxu0
        %v881 = vadd.f32 %v749, %v880
        %882 = vdwg.mxu0
        %883 = vmatpush.msra.mxu0 0.0
        %884 = vmatpush.msra.mxu0 0.0
        %885 = vmatpush.msra.mxu0 0.0
        %886 = vmatpush.msra.mxu0 0.0
        %887 = vmatpush.msra.mxu0 0.0
        %888 = vmatpush.msra.mxu0 0.0
        %889 = vmatpush.msra.mxu0 0.0
        %890 = vmatpush.msra.mxu0 0.0
        %891 = vmatpush.msra.mxu0 0.0
        %892 = vmatpush.msra.mxu0 0.0
        %893 = vmatpush.msra.mxu0 0.0
        %894 = vmatpush.msra.mxu0 0.0
        %895 = vmatpush.msra.mxu0 %v475
        %896 = vmatpush.msra.mxu0 %v474
        %897 = vmatpush.msra.mxu0 %v473
        %898 = vmatpush.msra.mxu0 %v472
        %899 = vmatmul.f32.gmra.mxu0 %v761
        %v900 = vpop.f32.mrf.mxu0
        %v901 = vadd.f32 %v750, %v900
        %902 = vdwg.mxu0
        %903 = vmatpush.msra.mxu0 0.0
        %904 = vmatpush.msra.mxu0 0.0
        %905 = vmatpush.msra.mxu0 0.0
        %906 = vmatpush.msra.mxu0 0.0
        %907 = vmatpush.msra.mxu0 0.0
        %908 = vmatpush.msra.mxu0 0.0
        %909 = vmatpush.msra.mxu0 0.0
        %910 = vmatpush.msra.mxu0 0.0
        %911 = vmatpush.msra.mxu0 0.0
        %912 = vmatpush.msra.mxu0 0.0
        %913 = vmatpush.msra.mxu0 0.0
        %914 = vmatpush.msra.mxu0 0.0
        %915 = vmatpush.msra.mxu0 %v479
        %916 = vmatpush.msra.mxu0 %v478
        %917 = vmatpush.msra.mxu0 %v477
        %918 = vmatpush.msra.mxu0 %v476
        %919 = vmatmul.f32.gmra.mxu0 %v761
        %v920 = vpop.f32.mrf.mxu0
        %v921 = vadd.f32 %v751, %v920
        %922 = vdwg.mxu0
        %v931 = vperm.slane %v528, 0
        %v932 = vperm.slane %v529, 0
        %v933 = vperm.slane %v530, 0
        %v934 = vperm.slane %v531, 0
        %v935 = vperm.slane %v532, 0
        %v936 = vperm.slane %v533, 0
        %v937 = vperm.slane %v534, 0
        %v938 = vperm.slane %v535, 0
        %v948 = vsel %vm572, %v547, 0
        %950 = vmatpush.msra.mxu0 0.0
        %951 = vmatpush.msra.mxu0 0.0
        %952 = vmatpush.msra.mxu0 0.0
        %953 = vmatpush.msra.mxu0 0.0
        %954 = vmatpush.msra.mxu0 0.0
        %955 = vmatpush.msra.mxu0 0.0
        %956 = vmatpush.msra.mxu0 0.0
        %957 = vmatpush.msra.mxu0 0.0
        %958 = vmatpush.msra.mxu0 0.0
        %959 = vmatpush.msra.mxu0 0.0
        %960 = vmatpush.msra.mxu0 0.0
        %961 = vmatpush.msra.mxu0 0.0
        %962 = vmatpush.msra.mxu0 %v483
        %963 = vmatpush.msra.mxu0 %v482
        %964 = vmatpush.msra.mxu0 %v481
        %965 = vmatpush.msra.mxu0 %v480
        %966 = vmatmul.f32.gmra.mxu0 %v948
        %v967 = vpop.f32.mrf.mxu0
        %v968 = vadd.f32 %v931, %v967
        %969 = vdwg.mxu0
        %970 = vmatpush.msra.mxu0 0.0
        %971 = vmatpush.msra.mxu0 0.0
        %972 = vmatpush.msra.mxu0 0.0
        %973 = vmatpush.msra.mxu0 0.0
        %974 = vmatpush.msra.mxu0 0.0
        %975 = vmatpush.msra.mxu0 0.0
        %976 = vmatpush.msra.mxu0 0.0
        %977 = vmatpush.msra.mxu0 0.0
        %978 = vmatpush.msra.mxu0 0.0
        %979 = vmatpush.msra.mxu0 0.0
        %980 = vmatpush.msra.mxu0 0.0
        %981 = vmatpush.msra.mxu0 0.0
        %982 = vmatpush.msra.mxu0 %v487
        %983 = vmatpush.msra.mxu0 %v486
        %984 = vmatpush.msra.mxu0 %v485
        %985 = vmatpush.msra.mxu0 %v484
        %986 = vmatmul.f32.gmra.mxu0 %v948
        %v987 = vpop.f32.mrf.mxu0
        %v988 = vadd.f32 %v932, %v987
        %989 = vdwg.mxu0
        %990 = vmatpush.msra.mxu0 0.0
        %991 = vmatpush.msra.mxu0 0.0
        %992 = vmatpush.msra.mxu0 0.0
        %993 = vmatpush.msra.mxu0 0.0
        %994 = vmatpush.msra.mxu0 0.0
        %995 = vmatpush.msra.mxu0 0.0
        %996 = vmatpush.msra.mxu0 0.0
        %997 = vmatpush.msra.mxu0 0.0
        %998 = vmatpush.msra.mxu0 0.0
        %999 = vmatpush.msra.mxu0 0.0
        %1000 = vmatpush.msra.mxu0 0.0
        %1001 = vmatpush.msra.mxu0 0.0
        %1002 = vmatpush.msra.mxu0 %v491
        %1003 = vmatpush.msra.mxu0 %v490
        %1004 = vmatpush.msra.mxu0 %v489
        %1005 = vmatpush.msra.mxu0 %v488
        %1006 = vmatmul.f32.gmra.mxu0 %v948
        %v1007 = vpop.f32.mrf.mxu0
        %v1008 = vadd.f32 %v933, %v1007
        %1009 = vdwg.mxu0
        %1010 = vmatpush.msra.mxu0 0.0
        %1011 = vmatpush.msra.mxu0 0.0
        %1012 = vmatpush.msra.mxu0 0.0
        %1013 = vmatpush.msra.mxu0 0.0
        %1014 = vmatpush.msra.mxu0 0.0
        %1015 = vmatpush.msra.mxu0 0.0
        %1016 = vmatpush.msra.mxu0 0.0
        %1017 = vmatpush.msra.mxu0 0.0
        %1018 = vmatpush.msra.mxu0 0.0
        %1019 = vmatpush.msra.mxu0 0.0
        %1020 = vmatpush.msra.mxu0 0.0
        %1021 = vmatpush.msra.mxu0 0.0
        %1022 = vmatpush.msra.mxu0 %v495
        %1023 = vmatpush.msra.mxu0 %v494
        %1024 = vmatpush.msra.mxu0 %v493
        %1025 = vmatpush.msra.mxu0 %v492
        %1026 = vmatmul.f32.gmra.mxu0 %v948
        %v1027 = vpop.f32.mrf.mxu0
        %v1028 = vadd.f32 %v934, %v1027
        %1029 = vdwg.mxu0
        %1030 = vmatpush.msra.mxu0 0.0
        %1031 = vmatpush.msra.mxu0 0.0
        %1032 = vmatpush.msra.mxu0 0.0
        %1033 = vmatpush.msra.mxu0 0.0
        %1034 = vmatpush.msra.mxu0 0.0
        %1035 = vmatpush.msra.mxu0 0.0
        %1036 = vmatpush.msra.mxu0 0.0
        %1037 = vmatpush.msra.mxu0 0.0
        %1038 = vmatpush.msra.mxu0 0.0
        %1039 = vmatpush.msra.mxu0 0.0
        %1040 = vmatpush.msra.mxu0 0.0
        %1041 = vmatpush.msra.mxu0 0.0
        %1042 = vmatpush.msra.mxu0 %v499
        %1043 = vmatpush.msra.mxu0 %v498
        %1044 = vmatpush.msra.mxu0 %v497
        %1045 = vmatpush.msra.mxu0 %v496
        %1046 = vmatmul.f32.gmra.mxu0 %v948
        %v1047 = vpop.f32.mrf.mxu0
        %v1048 = vadd.f32 %v935, %v1047
        %1049 = vdwg.mxu0
        %1050 = vmatpush.msra.mxu0 0.0
        %1051 = vmatpush.msra.mxu0 0.0
        %1052 = vmatpush.msra.mxu0 0.0
        %1053 = vmatpush.msra.mxu0 0.0
        %1054 = vmatpush.msra.mxu0 0.0
        %1055 = vmatpush.msra.mxu0 0.0
        %1056 = vmatpush.msra.mxu0 0.0
        %1057 = vmatpush.msra.mxu0 0.0
        %1058 = vmatpush.msra.mxu0 0.0
        %1059 = vmatpush.msra.mxu0 0.0
        %1060 = vmatpush.msra.mxu0 0.0
        %1061 = vmatpush.msra.mxu0 0.0
        %1062 = vmatpush.msra.mxu0 %v503
        %1063 = vmatpush.msra.mxu0 %v502
        %1064 = vmatpush.msra.mxu0 %v501
        %1065 = vmatpush.msra.mxu0 %v500
        %1066 = vmatmul.f32.gmra.mxu0 %v948
        %v1067 = vpop.f32.mrf.mxu0
        %v1068 = vadd.f32 %v936, %v1067
        %1069 = vdwg.mxu0
        %1070 = vmatpush.msra.mxu0 0.0
        %1071 = vmatpush.msra.mxu0 0.0
        %1072 = vmatpush.msra.mxu0 0.0
        %1073 = vmatpush.msra.mxu0 0.0
        %1074 = vmatpush.msra.mxu0 0.0
        %1075 = vmatpush.msra.mxu0 0.0
        %1076 = vmatpush.msra.mxu0 0.0
        %1077 = vmatpush.msra.mxu0 0.0
        %1078 = vmatpush.msra.mxu0 0.0
        %1079 = vmatpush.msra.mxu0 0.0
        %1080 = vmatpush.msra.mxu0 0.0
        %1081 = vmatpush.msra.mxu0 0.0
        %1082 = vmatpush.msra.mxu0 %v507
        %1083 = vmatpush.msra.mxu0 %v506
        %1084 = vmatpush.msra.mxu0 %v505
        %1085 = vmatpush.msra.mxu0 %v504
        %1086 = vmatmul.f32.gmra.mxu0 %v948
        %v1087 = vpop.f32.mrf.mxu0
        %v1088 = vadd.f32 %v937, %v1087
        %1089 = vdwg.mxu0
        %1090 = vmatpush.msra.mxu0 0.0
        %1091 = vmatpush.msra.mxu0 0.0
        %1092 = vmatpush.msra.mxu0 0.0
        %1093 = vmatpush.msra.mxu0 0.0
        %1094 = vmatpush.msra.mxu0 0.0
        %1095 = vmatpush.msra.mxu0 0.0
        %1096 = vmatpush.msra.mxu0 0.0
        %1097 = vmatpush.msra.mxu0 0.0
        %1098 = vmatpush.msra.mxu0 0.0
        %1099 = vmatpush.msra.mxu0 0.0
        %1100 = vmatpush.msra.mxu0 0.0
        %1101 = vmatpush.msra.mxu0 0.0
        %1102 = vmatpush.msra.mxu0 %v511
        %1103 = vmatpush.msra.mxu0 %v510
        %1104 = vmatpush.msra.mxu0 %v509
        %1105 = vmatpush.msra.mxu0 %v508
        %1106 = vmatmul.f32.gmra.mxu0 %v948
        %v1107 = vpop.f32.mrf.mxu0
        %v1108 = vadd.f32 %v938, %v1107
        %1109 = vdwg.mxu0
        %vm1110 = vcmask 31744
        %v1112 = vsel %vm1110, %v594, 0
        %v1115 = vsel %vm1110, %v781, 0
        %1117 = vmatpush.xpose.msra.mxu0 0.0
        %1118 = vmatpush.xpose.msra.mxu0 0.0
        %1119 = vmatpush.xpose.msra.mxu0 0.0
        %1120 = vmatpush.xpose.msra.mxu0 0.0
        %1121 = vmatpush.xpose.msra.mxu0 0.0
        %1122 = vmatpush.xpose.msra.mxu0 0.0
        %1123 = vmatpush.xpose.msra.mxu0 0.0
        %1124 = vmatpush.xpose.msra.mxu0 0.0
        %1125 = vmatpush.xpose.msra.mxu0 0.0
        %1126 = vmatpush.xpose.msra.mxu0 0.0
        %1127 = vmatpush.xpose.msra.mxu0 0.0
        %1128 = vmatpush.xpose.msra.mxu0 0.0
        %1129 = vmatpush.xpose.msra.mxu0 0.0
        %1130 = vmatpush.xpose.msra.mxu0 0.0
        %1131 = vmatpush.xpose.msra.mxu0 0.0
        %1132 = vmatpush.xpose.msra.mxu0 %v1115
        %1133 = vmatmul.f32.gmra.mxu0 %v1112
        %v1134 = vpop.f32.mrf.mxu0
        %v1135 = vadd.f32 0.0, %v1134
        %1136 = vdwg.mxu0
        %v1138 = vsel %vm1110, %v614, 0
        %v1141 = vsel %vm1110, %v801, 0
        %1143 = vmatpush.xpose.msra.mxu0 0.0
        %1144 = vmatpush.xpose.msra.mxu0 0.0
        %1145 = vmatpush.xpose.msra.mxu0 0.0
        %1146 = vmatpush.xpose.msra.mxu0 0.0
        %1147 = vmatpush.xpose.msra.mxu0 0.0
        %1148 = vmatpush.xpose.msra.mxu0 0.0
        %1149 = vmatpush.xpose.msra.mxu0 0.0
        %1150 = vmatpush.xpose.msra.mxu0 0.0
        %1151 = vmatpush.xpose.msra.mxu0 0.0
        %1152 = vmatpush.xpose.msra.mxu0 0.0
        %1153 = vmatpush.xpose.msra.mxu0 0.0
        %1154 = vmatpush.xpose.msra.mxu0 0.0
        %1155 = vmatpush.xpose.msra.mxu0 0.0
        %1156 = vmatpush.xpose.msra.mxu0 0.0
        %1157 = vmatpush.xpose.msra.mxu0 0.0
        %1158 = vmatpush.xpose.msra.mxu0 %v1141
        %1159 = vmatmul.f32.gmra.mxu0 %v1138
        %v1160 = vpop.f32.mrf.mxu0
        %v1161 = vadd.f32 0.0, %v1160
        %1162 = vdwg.mxu0
        %v1164 = vsel %vm1110, %v634, 0
        %v1167 = vsel %vm1110, %v821, 0
        %1169 = vmatpush.xpose.msra.mxu0 0.0
        %1170 = vmatpush.xpose.msra.mxu0 0.0
        %1171 = vmatpush.xpose.msra.mxu0 0.0
        %1172 = vmatpush.xpose.msra.mxu0 0.0
        %1173 = vmatpush.xpose.msra.mxu0 0.0
        %1174 = vmatpush.xpose.msra.mxu0 0.0
        %1175 = vmatpush.xpose.msra.mxu0 0.0
        %1176 = vmatpush.xpose.msra.mxu0 0.0
        %1177 = vmatpush.xpose.msra.mxu0 0.0
        %1178 = vmatpush.xpose.msra.mxu0 0.0
        %1179 = vmatpush.xpose.msra.mxu0 0.0
        %1180 = vmatpush.xpose.msra.mxu0 0.0
        %1181 = vmatpush.xpose.msra.mxu0 0.0
        %1182 = vmatpush.xpose.msra.mxu0 0.0
        %1183 = vmatpush.xpose.msra.mxu0 0.0
        %1184 = vmatpush.xpose.msra.mxu0 %v1167
        %1185 = vmatmul.f32.gmra.mxu0 %v1164
        %v1186 = vpop.f32.mrf.mxu0
        %v1187 = vadd.f32 0.0, %v1186
        %1188 = vdwg.mxu0
        %v1190 = vsel %vm1110, %v654, 0
        %v1193 = vsel %vm1110, %v841, 0
        %1195 = vmatpush.xpose.msra.mxu0 0.0
        %1196 = vmatpush.xpose.msra.mxu0 0.0
        %1197 = vmatpush.xpose.msra.mxu0 0.0
        %1198 = vmatpush.xpose.msra.mxu0 0.0
        %1199 = vmatpush.xpose.msra.mxu0 0.0
        %1200 = vmatpush.xpose.msra.mxu0 0.0
        %1201 = vmatpush.xpose.msra.mxu0 0.0
        %1202 = vmatpush.xpose.msra.mxu0 0.0
        %1203 = vmatpush.xpose.msra.mxu0 0.0
        %1204 = vmatpush.xpose.msra.mxu0 0.0
        %1205 = vmatpush.xpose.msra.mxu0 0.0
        %1206 = vmatpush.xpose.msra.mxu0 0.0
        %1207 = vmatpush.xpose.msra.mxu0 0.0
        %1208 = vmatpush.xpose.msra.mxu0 0.0
        %1209 = vmatpush.xpose.msra.mxu0 0.0
        %1210 = vmatpush.xpose.msra.mxu0 %v1193
        %1211 = vmatmul.f32.gmra.mxu0 %v1190
        %v1212 = vpop.f32.mrf.mxu0
        %v1213 = vadd.f32 0.0, %v1212
        %1214 = vdwg.mxu0
        %v1216 = vsel %vm1110, %v674, 0
        %v1219 = vsel %vm1110, %v861, 0
        %1221 = vmatpush.xpose.msra.mxu0 0.0
        %1222 = vmatpush.xpose.msra.mxu0 0.0
        %1223 = vmatpush.xpose.msra.mxu0 0.0
        %1224 = vmatpush.xpose.msra.mxu0 0.0
        %1225 = vmatpush.xpose.msra.mxu0 0.0
        %1226 = vmatpush.xpose.msra.mxu0 0.0
        %1227 = vmatpush.xpose.msra.mxu0 0.0
        %1228 = vmatpush.xpose.msra.mxu0 0.0
        %1229 = vmatpush.xpose.msra.mxu0 0.0
        %1230 = vmatpush.xpose.msra.mxu0 0.0
        %1231 = vmatpush.xpose.msra.mxu0 0.0
        %1232 = vmatpush.xpose.msra.mxu0 0.0
        %1233 = vmatpush.xpose.msra.mxu0 0.0
        %1234 = vmatpush.xpose.msra.mxu0 0.0
        %1235 = vmatpush.xpose.msra.mxu0 0.0
        %1236 = vmatpush.xpose.msra.mxu0 %v1219
        %1237 = vmatmul.f32.gmra.mxu0 %v1216
        %v1238 = vpop.f32.mrf.mxu0
        %v1239 = vadd.f32 0.0, %v1238
        %1240 = vdwg.mxu0
        %v1242 = vsel %vm1110, %v694, 0
        %v1245 = vsel %vm1110, %v881, 0
        %1247 = vmatpush.xpose.msra.mxu0 0.0
        %1248 = vmatpush.xpose.msra.mxu0 0.0
        %1249 = vmatpush.xpose.msra.mxu0 0.0
        %1250 = vmatpush.xpose.msra.mxu0 0.0
        %1251 = vmatpush.xpose.msra.mxu0 0.0
        %1252 = vmatpush.xpose.msra.mxu0 0.0
        %1253 = vmatpush.xpose.msra.mxu0 0.0
        %1254 = vmatpush.xpose.msra.mxu0 0.0
        %1255 = vmatpush.xpose.msra.mxu0 0.0
        %1256 = vmatpush.xpose.msra.mxu0 0.0
        %1257 = vmatpush.xpose.msra.mxu0 0.0
        %1258 = vmatpush.xpose.msra.mxu0 0.0
        %1259 = vmatpush.xpose.msra.mxu0 0.0
        %1260 = vmatpush.xpose.msra.mxu0 0.0
        %1261 = vmatpush.xpose.msra.mxu0 0.0
        %1262 = vmatpush.xpose.msra.mxu0 %v1245
        %1263 = vmatmul.f32.gmra.mxu0 %v1242
        %v1264 = vpop.f32.mrf.mxu0
        %v1265 = vadd.f32 0.0, %v1264
        %1266 = vdwg.mxu0
        %v1268 = vsel %vm1110, %v714, 0
        %v1271 = vsel %vm1110, %v901, 0
        %1273 = vmatpush.xpose.msra.mxu0 0.0
        %1274 = vmatpush.xpose.msra.mxu0 0.0
        %1275 = vmatpush.xpose.msra.mxu0 0.0
        %1276 = vmatpush.xpose.msra.mxu0 0.0
        %1277 = vmatpush.xpose.msra.mxu0 0.0
        %1278 = vmatpush.xpose.msra.mxu0 0.0
        %1279 = vmatpush.xpose.msra.mxu0 0.0
        %1280 = vmatpush.xpose.msra.mxu0 0.0
        %1281 = vmatpush.xpose.msra.mxu0 0.0
        %1282 = vmatpush.xpose.msra.mxu0 0.0
        %1283 = vmatpush.xpose.msra.mxu0 0.0
        %1284 = vmatpush.xpose.msra.mxu0 0.0
        %1285 = vmatpush.xpose.msra.mxu0 0.0
        %1286 = vmatpush.xpose.msra.mxu0 0.0
        %1287 = vmatpush.xpose.msra.mxu0 0.0
        %1288 = vmatpush.xpose.msra.mxu0 %v1271
        %1289 = vmatmul.f32.gmra.mxu0 %v1268
        %v1290 = vpop.f32.mrf.mxu0
        %v1291 = vadd.f32 0.0, %v1290
        %1292 = vdwg.mxu0
        %v1294 = vsel %vm1110, %v734, 0
        %v1297 = vsel %vm1110, %v921, 0
        %1299 = vmatpush.xpose.msra.mxu0 0.0
        %1300 = vmatpush.xpose.msra.mxu0 0.0
        %1301 = vmatpush.xpose.msra.mxu0 0.0
        %1302 = vmatpush.xpose.msra.mxu0 0.0
        %1303 = vmatpush.xpose.msra.mxu0 0.0
        %1304 = vmatpush.xpose.msra.mxu0 0.0
        %1305 = vmatpush.xpose.msra.mxu0 0.0
        %1306 = vmatpush.xpose.msra.mxu0 0.0
        %1307 = vmatpush.xpose.msra.mxu0 0.0
        %1308 = vmatpush.xpose.msra.mxu0 0.0
        %1309 = vmatpush.xpose.msra.mxu0 0.0
        %1310 = vmatpush.xpose.msra.mxu0 0.0
        %1311 = vmatpush.xpose.msra.mxu0 0.0
        %1312 = vmatpush.xpose.msra.mxu0 0.0
        %1313 = vmatpush.xpose.msra.mxu0 0.0
        %1314 = vmatpush.xpose.msra.mxu0 %v1297
        %1315 = vmatmul.f32.gmra.mxu0 %v1294
        %v1316 = vpop.f32.mrf.mxu0
        %v1317 = vadd.f32 0.0, %v1316
        %1318 = vdwg.mxu0
        %vm1319 = vcmask 64512
        %v1320 = vsel %vm1319, %v1135, -inf
        %1321 = vmax.xlane.f32.xlu0 %v1320
        %v1322 = vpop.xlane.xlu0 %1321
        %v1323 = vsel %vm1319, %v1161, -inf
        %1324 = vmax.xlane.f32.xlu0 %v1323
        %v1325 = vpop.xlane.xlu0 %1324
        %v1326 = vsel %vm1319, %v1187, -inf
        %1327 = vmax.xlane.f32.xlu0 %v1326
        %v1328 = vpop.xlane.xlu0 %1327
        %v1329 = vsel %vm1319, %v1213, -inf
        %1330 = vmax.xlane.f32.xlu0 %v1329
        %v1331 = vpop.xlane.xlu0 %1330
        %v1332 = vsel %vm1319, %v1239, -inf
        %1333 = vmax.xlane.f32.xlu0 %v1332
        %v1334 = vpop.xlane.xlu0 %1333
        %v1335 = vsel %vm1319, %v1265, -inf
        %1336 = vmax.xlane.f32.xlu0 %v1335
        %v1337 = vpop.xlane.xlu0 %1336
        %v1338 = vsel %vm1319, %v1291, -inf
        %1339 = vmax.xlane.f32.xlu0 %v1338
        %v1340 = vpop.xlane.xlu0 %1339
        %v1341 = vsel %vm1319, %v1317, -inf
        %1342 = vmax.xlane.f32.xlu0 %v1341
        %v1343 = vpop.xlane.xlu0 %1342
        %v1344 = vsub.f32 %v1135, %v1322
        %v1345 = vsub.f32 %v1161, %v1325
        %v1346 = vsub.f32 %v1187, %v1328
        %v1347 = vsub.f32 %v1213, %v1331
        %v1348 = vsub.f32 %v1239, %v1334
        %v1349 = vsub.f32 %v1265, %v1337
        %v1350 = vsub.f32 %v1291, %v1340
        %v1351 = vsub.f32 %v1317, %v1343
        %v1352 = vmul.f32 %v1344, 1.442695
        %v1353 = vpow.pop %v1352
        %v1354 = vmul.f32 %v1345, 1.442695
        %v1355 = vpow.pop %v1354
        %v1356 = vmul.f32 %v1346, 1.442695
        %v1357 = vpow.pop %v1356
        %v1358 = vmul.f32 %v1347, 1.442695
        %v1359 = vpow.pop %v1358
        %v1360 = vmul.f32 %v1348, 1.442695
        %v1361 = vpow.pop %v1360
        %v1362 = vmul.f32 %v1349, 1.442695
        %v1363 = vpow.pop %v1362
        %v1364 = vmul.f32 %v1350, 1.442695
        %v1365 = vpow.pop %v1364
        %v1366 = vmul.f32 %v1351, 1.442695
        %v1367 = vpow.pop %v1366
        %v1368 = vsel %vm1319, %v1353, 0.0
        %1369 = vadd.xlane.f32.xlu0 %v1368
        %v1370 = vpop.xlane.xlu0 %1369
        %v1371 = vsel %vm1319, %v1355, 0.0
        %1372 = vadd.xlane.f32.xlu0 %v1371
        %v1373 = vpop.xlane.xlu0 %1372
        %v1374 = vsel %vm1319, %v1357, 0.0
        %1375 = vadd.xlane.f32.xlu0 %v1374
        %v1376 = vpop.xlane.xlu0 %1375
        %v1377 = vsel %vm1319, %v1359, 0.0
        %1378 = vadd.xlane.f32.xlu0 %v1377
        %v1379 = vpop.xlane.xlu0 %1378
        %v1380 = vsel %vm1319, %v1361, 0.0
        %1381 = vadd.xlane.f32.xlu0 %v1380
        %v1382 = vpop.xlane.xlu0 %1381
        %v1383 = vsel %vm1319, %v1363, 0.0
        %1384 = vadd.xlane.f32.xlu0 %v1383
        %v1385 = vpop.xlane.xlu0 %1384
        %v1386 = vsel %vm1319, %v1365, 0.0
        %1387 = vadd.xlane.f32.xlu0 %v1386
        %v1388 = vpop.xlane.xlu0 %1387
        %v1389 = vsel %vm1319, %v1367, 0.0
        %1390 = vadd.xlane.f32.xlu0 %v1389
        %v1391 = vpop.xlane.xlu0 %1390
        %v1392 = vrcp.pop %v1370
        %v1393 = vrcp.pop %v1373
        %v1394 = vrcp.pop %v1376
        %v1395 = vrcp.pop %v1379
        %v1396 = vrcp.pop %v1382
        %v1397 = vrcp.pop %v1385
        %v1398 = vrcp.pop %v1388
        %v1399 = vrcp.pop %v1391
        %v1400 = vmul.f32 %v1353, %v1392
        %v1401 = vmul.f32 %v1355, %v1393
        %v1402 = vmul.f32 %v1357, %v1394
        %v1403 = vmul.f32 %v1359, %v1395
        %v1404 = vmul.f32 %v1361, %v1396
        %v1405 = vmul.f32 %v1363, %v1397
        %v1406 = vmul.f32 %v1365, %v1398
        %v1407 = vmul.f32 %v1367, %v1399
        %v1409 = vsel %vm1319, %v1400, 0
        %1411 = vmatpush.msra.mxu0 0.0
        %1412 = vmatpush.msra.mxu0 0.0
        %1413 = vmatpush.msra.mxu0 0.0
        %1414 = vmatpush.msra.mxu0 0.0
        %1415 = vmatpush.msra.mxu0 0.0
        %1416 = vmatpush.msra.mxu0 0.0
        %1417 = vmatpush.msra.mxu0 0.0
        %1418 = vmatpush.msra.mxu0 0.0
        %1419 = vmatpush.msra.mxu0 0.0
        %1420 = vmatpush.msra.mxu0 0.0
        %1421 = vmatpush.msra.mxu0 0.0
        %1422 = vmatpush.msra.mxu0 0.0
        %1423 = vmatpush.msra.mxu0 0.0
        %1424 = vmatpush.msra.mxu0 0.0
        %1425 = vmatpush.msra.mxu0 0.0
        %1426 = vmatpush.msra.mxu0 %v968
        %1427 = vmatmul.f32.gmra.mxu0 %v1409
        %v1428 = vpop.f32.mrf.mxu0
        %v1429 = vadd.f32 0.0, %v1428
        %1430 = vdwg.mxu0
        %v1432 = vsel %vm1319, %v1401, 0
        %1434 = vmatpush.msra.mxu0 0.0
        %1435 = vmatpush.msra.mxu0 0.0
        %1436 = vmatpush.msra.mxu0 0.0
        %1437 = vmatpush.msra.mxu0 0.0
        %1438 = vmatpush.msra.mxu0 0.0
        %1439 = vmatpush.msra.mxu0 0.0
        %1440 = vmatpush.msra.mxu0 0.0
        %1441 = vmatpush.msra.mxu0 0.0
        %1442 = vmatpush.msra.mxu0 0.0
        %1443 = vmatpush.msra.mxu0 0.0
        %1444 = vmatpush.msra.mxu0 0.0
        %1445 = vmatpush.msra.mxu0 0.0
        %1446 = vmatpush.msra.mxu0 0.0
        %1447 = vmatpush.msra.mxu0 0.0
        %1448 = vmatpush.msra.mxu0 0.0
        %1449 = vmatpush.msra.mxu0 %v988
        %1450 = vmatmul.f32.gmra.mxu0 %v1432
        %v1451 = vpop.f32.mrf.mxu0
        %v1452 = vadd.f32 0.0, %v1451
        %1453 = vdwg.mxu0
        %v1455 = vsel %vm1319, %v1402, 0
        %1457 = vmatpush.msra.mxu0 0.0
        %1458 = vmatpush.msra.mxu0 0.0
        %1459 = vmatpush.msra.mxu0 0.0
        %1460 = vmatpush.msra.mxu0 0.0
        %1461 = vmatpush.msra.mxu0 0.0
        %1462 = vmatpush.msra.mxu0 0.0
        %1463 = vmatpush.msra.mxu0 0.0
        %1464 = vmatpush.msra.mxu0 0.0
        %1465 = vmatpush.msra.mxu0 0.0
        %1466 = vmatpush.msra.mxu0 0.0
        %1467 = vmatpush.msra.mxu0 0.0
        %1468 = vmatpush.msra.mxu0 0.0
        %1469 = vmatpush.msra.mxu0 0.0
        %1470 = vmatpush.msra.mxu0 0.0
        %1471 = vmatpush.msra.mxu0 0.0
        %1472 = vmatpush.msra.mxu0 %v1008
        %1473 = vmatmul.f32.gmra.mxu0 %v1455
        %v1474 = vpop.f32.mrf.mxu0
        %v1475 = vadd.f32 0.0, %v1474
        %1476 = vdwg.mxu0
        %v1478 = vsel %vm1319, %v1403, 0
        %1480 = vmatpush.msra.mxu0 0.0
        %1481 = vmatpush.msra.mxu0 0.0
        %1482 = vmatpush.msra.mxu0 0.0
        %1483 = vmatpush.msra.mxu0 0.0
        %1484 = vmatpush.msra.mxu0 0.0
        %1485 = vmatpush.msra.mxu0 0.0
        %1486 = vmatpush.msra.mxu0 0.0
        %1487 = vmatpush.msra.mxu0 0.0
        %1488 = vmatpush.msra.mxu0 0.0
        %1489 = vmatpush.msra.mxu0 0.0
        %1490 = vmatpush.msra.mxu0 0.0
        %1491 = vmatpush.msra.mxu0 0.0
        %1492 = vmatpush.msra.mxu0 0.0
        %1493 = vmatpush.msra.mxu0 0.0
        %1494 = vmatpush.msra.mxu0 0.0
        %1495 = vmatpush.msra.mxu0 %v1028
        %1496 = vmatmul.f32.gmra.mxu0 %v1478
        %v1497 = vpop.f32.mrf.mxu0
        %v1498 = vadd.f32 0.0, %v1497
        %1499 = vdwg.mxu0
        %v1501 = vsel %vm1319, %v1404, 0
        %1503 = vmatpush.msra.mxu0 0.0
        %1504 = vmatpush.msra.mxu0 0.0
        %1505 = vmatpush.msra.mxu0 0.0
        %1506 = vmatpush.msra.mxu0 0.0
        %1507 = vmatpush.msra.mxu0 0.0
        %1508 = vmatpush.msra.mxu0 0.0
        %1509 = vmatpush.msra.mxu0 0.0
        %1510 = vmatpush.msra.mxu0 0.0
        %1511 = vmatpush.msra.mxu0 0.0
        %1512 = vmatpush.msra.mxu0 0.0
        %1513 = vmatpush.msra.mxu0 0.0
        %1514 = vmatpush.msra.mxu0 0.0
        %1515 = vmatpush.msra.mxu0 0.0
        %1516 = vmatpush.msra.mxu0 0.0
        %1517 = vmatpush.msra.mxu0 0.0
        %1518 = vmatpush.msra.mxu0 %v1048
        %1519 = vmatmul.f32.gmra.mxu0 %v1501
        %v1520 = vpop.f32.mrf.mxu0
        %v1521 = vadd.f32 0.0, %v1520
        %1522 = vdwg.mxu0
        %v1524 = vsel %vm1319, %v1405, 0
        %1526 = vmatpush.msra.mxu0 0.0
        %1527 = vmatpush.msra.mxu0 0.0
        %1528 = vmatpush.msra.mxu0 0.0
        %1529 = vmatpush.msra.mxu0 0.0
        %1530 = vmatpush.msra.mxu0 0.0
        %1531 = vmatpush.msra.mxu0 0.0
        %1532 = vmatpush.msra.mxu0 0.0
        %1533 = vmatpush.msra.mxu0 0.0
        %1534 = vmatpush.msra.mxu0 0.0
        %1535 = vmatpush.msra.mxu0 0.0
        %1536 = vmatpush.msra.mxu0 0.0
        %1537 = vmatpush.msra.mxu0 0.0
        %1538 = vmatpush.msra.mxu0 0.0
        %1539 = vmatpush.msra.mxu0 0.0
        %1540 = vmatpush.msra.mxu0 0.0
        %1541 = vmatpush.msra.mxu0 %v1068
        %1542 = vmatmul.f32.gmra.mxu0 %v1524
        %v1543 = vpop.f32.mrf.mxu0
        %v1544 = vadd.f32 0.0, %v1543
        %1545 = vdwg.mxu0
        %v1547 = vsel %vm1319, %v1406, 0
        %1549 = vmatpush.msra.mxu0 0.0
        %1550 = vmatpush.msra.mxu0 0.0
        %1551 = vmatpush.msra.mxu0 0.0
        %1552 = vmatpush.msra.mxu0 0.0
        %1553 = vmatpush.msra.mxu0 0.0
        %1554 = vmatpush.msra.mxu0 0.0
        %1555 = vmatpush.msra.mxu0 0.0
        %1556 = vmatpush.msra.mxu0 0.0
        %1557 = vmatpush.msra.mxu0 0.0
        %1558 = vmatpush.msra.mxu0 0.0
        %1559 = vmatpush.msra.mxu0 0.0
        %1560 = vmatpush.msra.mxu0 0.0
        %1561 = vmatpush.msra.mxu0 0.0
        %1562 = vmatpush.msra.mxu0 0.0
        %1563 = vmatpush.msra.mxu0 0.0
        %1564 = vmatpush.msra.mxu0 %v1088
        %1565 = vmatmul.f32.gmra.mxu0 %v1547
        %v1566 = vpop.f32.mrf.mxu0
        %v1567 = vadd.f32 0.0, %v1566
        %1568 = vdwg.mxu0
        %v1570 = vsel %vm1319, %v1407, 0
        %1572 = vmatpush.msra.mxu0 0.0
        %1573 = vmatpush.msra.mxu0 0.0
        %1574 = vmatpush.msra.mxu0 0.0
        %1575 = vmatpush.msra.mxu0 0.0
        %1576 = vmatpush.msra.mxu0 0.0
        %1577 = vmatpush.msra.mxu0 0.0
        %1578 = vmatpush.msra.mxu0 0.0
        %1579 = vmatpush.msra.mxu0 0.0
        %1580 = vmatpush.msra.mxu0 0.0
        %1581 = vmatpush.msra.mxu0 0.0
        %1582 = vmatpush.msra.mxu0 0.0
        %1583 = vmatpush.msra.mxu0 0.0
        %1584 = vmatpush.msra.mxu0 0.0
        %1585 = vmatpush.msra.mxu0 0.0
        %1586 = vmatpush.msra.mxu0 0.0
        %1587 = vmatpush.msra.mxu0 %v1108
        %1588 = vmatmul.f32.gmra.mxu0 %v1570
        %v1589 = vpop.f32.mrf.mxu0
        %v1590 = vadd.f32 0.0, %v1589
        %1591 = vdwg.mxu0
        %v1593 = vsel %vm1110, %v1429, 0
        %vm1595 = vcmask 1043456
        %v1597 = vsel %vm1595, %v536, 0
        %1599 = vmatpush.msra.mxu0 0.0
        %1600 = vmatpush.msra.mxu0 0.0
        %1601 = vmatpush.msra.mxu0 0.0
        %1602 = vmatpush.msra.mxu0 0.0
        %1603 = vmatpush.msra.mxu0 0.0
        %1604 = vmatpush.msra.mxu0 0.0
        %1605 = vmatpush.msra.mxu0 0.0
        %1606 = vmatpush.msra.mxu0 0.0
        %1607 = vmatpush.msra.mxu0 0.0
        %1608 = vmatpush.msra.mxu0 0.0
        %1609 = vmatpush.msra.mxu0 0.0
        %1610 = vmatpush.msra.mxu0 0.0
        %1611 = vmatpush.msra.mxu0 0.0
        %1612 = vmatpush.msra.mxu0 0.0
        %1613 = vmatpush.msra.mxu0 0.0
        %1614 = vmatpush.msra.mxu0 %v1597
        %1615 = vmatmul.f32.gmra.mxu0 %v1593
        %v1616 = vpop.f32.mrf.mxu0
        %v1617 = vadd.f32 0.0, %v1616
        %1618 = vdwg.mxu0
        %v1620 = vsel %vm1110, %v1452, 0
        %v1623 = vsel %vm1595, %v537, 0
        %1625 = vmatpush.msra.mxu0 0.0
        %1626 = vmatpush.msra.mxu0 0.0
        %1627 = vmatpush.msra.mxu0 0.0
        %1628 = vmatpush.msra.mxu0 0.0
        %1629 = vmatpush.msra.mxu0 0.0
        %1630 = vmatpush.msra.mxu0 0.0
        %1631 = vmatpush.msra.mxu0 0.0
        %1632 = vmatpush.msra.mxu0 0.0
        %1633 = vmatpush.msra.mxu0 0.0
        %1634 = vmatpush.msra.mxu0 0.0
        %1635 = vmatpush.msra.mxu0 0.0
        %1636 = vmatpush.msra.mxu0 0.0
        %1637 = vmatpush.msra.mxu0 0.0
        %1638 = vmatpush.msra.mxu0 0.0
        %1639 = vmatpush.msra.mxu0 0.0
        %1640 = vmatpush.msra.mxu0 %v1623
        %1641 = vmatmul.f32.gmra.mxu0 %v1620
        %v1642 = vpop.f32.mrf.mxu0
        %v1643 = vadd.f32 0.0, %v1642
        %1644 = vdwg.mxu0
        %v1646 = vsel %vm1110, %v1475, 0
        %v1649 = vsel %vm1595, %v538, 0
        %1651 = vmatpush.msra.mxu0 0.0
        %1652 = vmatpush.msra.mxu0 0.0
        %1653 = vmatpush.msra.mxu0 0.0
        %1654 = vmatpush.msra.mxu0 0.0
        %1655 = vmatpush.msra.mxu0 0.0
        %1656 = vmatpush.msra.mxu0 0.0
        %1657 = vmatpush.msra.mxu0 0.0
        %1658 = vmatpush.msra.mxu0 0.0
        %1659 = vmatpush.msra.mxu0 0.0
        %1660 = vmatpush.msra.mxu0 0.0
        %1661 = vmatpush.msra.mxu0 0.0
        %1662 = vmatpush.msra.mxu0 0.0
        %1663 = vmatpush.msra.mxu0 0.0
        %1664 = vmatpush.msra.mxu0 0.0
        %1665 = vmatpush.msra.mxu0 0.0
        %1666 = vmatpush.msra.mxu0 %v1649
        %1667 = vmatmul.f32.gmra.mxu0 %v1646
        %v1668 = vpop.f32.mrf.mxu0
        %v1669 = vadd.f32 0.0, %v1668
        %1670 = vdwg.mxu0
        %v1672 = vsel %vm1110, %v1498, 0
        %v1675 = vsel %vm1595, %v539, 0
        %1677 = vmatpush.msra.mxu0 0.0
        %1678 = vmatpush.msra.mxu0 0.0
        %1679 = vmatpush.msra.mxu0 0.0
        %1680 = vmatpush.msra.mxu0 0.0
        %1681 = vmatpush.msra.mxu0 0.0
        %1682 = vmatpush.msra.mxu0 0.0
        %1683 = vmatpush.msra.mxu0 0.0
        %1684 = vmatpush.msra.mxu0 0.0
        %1685 = vmatpush.msra.mxu0 0.0
        %1686 = vmatpush.msra.mxu0 0.0
        %1687 = vmatpush.msra.mxu0 0.0
        %1688 = vmatpush.msra.mxu0 0.0
        %1689 = vmatpush.msra.mxu0 0.0
        %1690 = vmatpush.msra.mxu0 0.0
        %1691 = vmatpush.msra.mxu0 0.0
        %1692 = vmatpush.msra.mxu0 %v1675
        %1693 = vmatmul.f32.gmra.mxu0 %v1672
        %v1694 = vpop.f32.mrf.mxu0
        %v1695 = vadd.f32 0.0, %v1694
        %1696 = vdwg.mxu0
        %v1698 = vsel %vm1110, %v1521, 0
        %v1701 = vsel %vm1595, %v540, 0
        %1703 = vmatpush.msra.mxu0 0.0
        %1704 = vmatpush.msra.mxu0 0.0
        %1705 = vmatpush.msra.mxu0 0.0
        %1706 = vmatpush.msra.mxu0 0.0
        %1707 = vmatpush.msra.mxu0 0.0
        %1708 = vmatpush.msra.mxu0 0.0
        %1709 = vmatpush.msra.mxu0 0.0
        %1710 = vmatpush.msra.mxu0 0.0
        %1711 = vmatpush.msra.mxu0 0.0
        %1712 = vmatpush.msra.mxu0 0.0
        %1713 = vmatpush.msra.mxu0 0.0
        %1714 = vmatpush.msra.mxu0 0.0
        %1715 = vmatpush.msra.mxu0 0.0
        %1716 = vmatpush.msra.mxu0 0.0
        %1717 = vmatpush.msra.mxu0 0.0
        %1718 = vmatpush.msra.mxu0 %v1701
        %1719 = vmatmul.f32.gmra.mxu0 %v1698
        %v1720 = vpop.f32.mrf.mxu0
        %v1721 = vadd.f32 0.0, %v1720
        %1722 = vdwg.mxu0
        %v1724 = vsel %vm1110, %v1544, 0
        %v1727 = vsel %vm1595, %v541, 0
        %1729 = vmatpush.msra.mxu0 0.0
        %1730 = vmatpush.msra.mxu0 0.0
        %1731 = vmatpush.msra.mxu0 0.0
        %1732 = vmatpush.msra.mxu0 0.0
        %1733 = vmatpush.msra.mxu0 0.0
        %1734 = vmatpush.msra.mxu0 0.0
        %1735 = vmatpush.msra.mxu0 0.0
        %1736 = vmatpush.msra.mxu0 0.0
        %1737 = vmatpush.msra.mxu0 0.0
        %1738 = vmatpush.msra.mxu0 0.0
        %1739 = vmatpush.msra.mxu0 0.0
        %1740 = vmatpush.msra.mxu0 0.0
        %1741 = vmatpush.msra.mxu0 0.0
        %1742 = vmatpush.msra.mxu0 0.0
        %1743 = vmatpush.msra.mxu0 0.0
        %1744 = vmatpush.msra.mxu0 %v1727
        %1745 = vmatmul.f32.gmra.mxu0 %v1724
        %v1746 = vpop.f32.mrf.mxu0
        %v1747 = vadd.f32 0.0, %v1746
        %1748 = vdwg.mxu0
        %v1750 = vsel %vm1110, %v1567, 0
        %v1753 = vsel %vm1595, %v542, 0
        %1755 = vmatpush.msra.mxu0 0.0
        %1756 = vmatpush.msra.mxu0 0.0
        %1757 = vmatpush.msra.mxu0 0.0
        %1758 = vmatpush.msra.mxu0 0.0
        %1759 = vmatpush.msra.mxu0 0.0
        %1760 = vmatpush.msra.mxu0 0.0
        %1761 = vmatpush.msra.mxu0 0.0
        %1762 = vmatpush.msra.mxu0 0.0
        %1763 = vmatpush.msra.mxu0 0.0
        %1764 = vmatpush.msra.mxu0 0.0
        %1765 = vmatpush.msra.mxu0 0.0
        %1766 = vmatpush.msra.mxu0 0.0
        %1767 = vmatpush.msra.mxu0 0.0
        %1768 = vmatpush.msra.mxu0 0.0
        %1769 = vmatpush.msra.mxu0 0.0
        %1770 = vmatpush.msra.mxu0 %v1753
        %1771 = vmatmul.f32.gmra.mxu0 %v1750
        %v1772 = vpop.f32.mrf.mxu0
        %v1773 = vadd.f32 0.0, %v1772
        %1774 = vdwg.mxu0
        %v1776 = vsel %vm1110, %v1590, 0
        %v1779 = vsel %vm1595, %v543, 0
        %1781 = vmatpush.msra.mxu0 0.0
        %1782 = vmatpush.msra.mxu0 0.0
        %1783 = vmatpush.msra.mxu0 0.0
        %1784 = vmatpush.msra.mxu0 0.0
        %1785 = vmatpush.msra.mxu0 0.0
        %1786 = vmatpush.msra.mxu0 0.0
        %1787 = vmatpush.msra.mxu0 0.0
        %1788 = vmatpush.msra.mxu0 0.0
        %1789 = vmatpush.msra.mxu0 0.0
        %1790 = vmatpush.msra.mxu0 0.0
        %1791 = vmatpush.msra.mxu0 0.0
        %1792 = vmatpush.msra.mxu0 0.0
        %1793 = vmatpush.msra.mxu0 0.0
        %1794 = vmatpush.msra.mxu0 0.0
        %1795 = vmatpush.msra.mxu0 0.0
        %1796 = vmatpush.msra.mxu0 %v1779
        %1797 = vmatmul.f32.gmra.mxu0 %v1776
        %v1798 = vpop.f32.mrf.mxu0
        %v1799 = vadd.f32 0.0, %v1798
        %1800 = vdwg.mxu0
        %v1801 = vadd.f32 %v1617, %v1643
        %v1802 = vadd.f32 %v1801, %v1669
        %v1803 = vadd.f32 %v1802, %v1695
        %v1804 = vadd.f32 %v1803, %v1721
        %v1805 = vadd.f32 %v1804, %v1747
        %v1806 = vadd.f32 %v1805, %v1773
        %v1807 = vadd.f32 %v1806, %v1799
        %v1809 = vperm.slane %v544, 0
        %v1811 = vadd.f32 %v1807, %v1809
        %1812 = vst [vmem:[%s403] sm:$0xff] %v1811
        %s1813 = sand.u32 %s279, 1
        %s1814 = scalar_lea.sflag [#allocation3], %s1813
        %s1815 = sand.u32 %s279, 1
        %s1816 = smul.addr %s1815, 8
        %s1817 = scalar_lea.vmem [#allocation2], %s1816
        // Predicated region
        $region65: #{tpu_custom_call.1} parent=63 // pred_check
          %p1818 = pneg %p289
        $region66: #{tpu_custom_call.1} parent=63 // pred_check_branch
          %1820 = sbr.rel (%p1818) target = $region68
        $region67: #{tpu_custom_call.1} parent=63 // pred_region
          %1822 = vsyncadd %s1814, 0
          %s1823 = smul.addr %s25, 8
          %s1824 = scalar_lea.hbm %s11, %s1823
          %s1826 = sshll.u32 %s1817, 4
          %s1827 = int_to_ptr.vmem [resolvable:$true] %s1826
          %s1828 = sshll.u32 %s1824, 4
          %s1829 = int_to_ptr.hbm [resolvable:$true] %s1828
          %1831 = dma.vmem_to_hbm [thread:$0]  %s1827, 128, %s1829, %s1814
        $region68: #{tpu_custom_call.1} parent=63 // pred_fallthru
          _
      $region64: #{tpu_custom_call.1} parent=5 // pred_fallthru
        _
      %p1832 = scmp.le.s32.totalorder 2, %s20
      // Predicated region
      $region69: #{tpu_custom_call.1} parent=5 // pred_check
        %p1833 = pneg %p1832
      $region70: #{tpu_custom_call.1} parent=5 // pred_check_branch
        %1835 = sbr.rel (%p1833) target = $region72
      $region71: #{tpu_custom_call.1} parent=5 // pred_region
        %s1836 = ssub.s32 %s20, 2
        // Predicated region
        $region73: #{tpu_custom_call.1} parent=71 // pred_check
          %p1837 = pneg %p295
        $region74: #{tpu_custom_call.1} parent=71 // pred_check_branch
          %1839 = sbr.rel (%p1837) target = $region76
        $region75: #{tpu_custom_call.1} parent=71 // pred_region
          %s1840 = sand.u32 %s280, 1
          %s1841 = scalar_lea.sflag [#allocation3], %s1840
          %s1842 = sand.u32 %s280, 1
          %s1843 = smul.addr %s1842, 8
          %s1844 = scalar_lea.vmem [#allocation2], %s1843
          %1846 = dma.done %s1841, 128
        $region76: #{tpu_custom_call.1} parent=71 // pred_fallthru
          _
      $region72: #{tpu_custom_call.1} parent=5 // pred_fallthru
        _
    $region6: #{tpu_custom_call.1} parent=1 // loop_footer
      %s24 = sadd.s32 1, %s20
    $region7: #{tpu_custom_call.1} parent=1 // loop_footer_branch
      %19 = sbr.rel target = $region3
    $region8: #{tpu_custom_call.1} parent=1 // loop_exit
      _
    %1847 = vsyncpa [#allocation3], 1
    %s1848 = scalar_lea.sflag [#allocation3], 1
    %1849 = vsyncpa %s1848, 1

</llo_original>
